<compile_context>
chip_gen: v7x
topology: tpu7x:2x2x1
jax: 0.10.0
libtpu: 0.0.40
codegen_flags: <defaults>
</compile_context>

<pallas_src>
import functools

import jax
import jax.numpy as jnp
from jax.experimental import pallas as pl
from jax.experimental.pallas import tpu as pltpu

IN_DIM = 384    # 6 * 8 * 8 bitboard, channel-major (PyTorch flatten) order
H1_DIM = 256
H2_DIM = 64     # logical fc2 width
H2_PAD = 128    # padded to a full lane width; padded columns are exactly zero
OUT_DIM = 1


def _elu(v):
    # PyTorch F.elu(alpha=1). exp(v) - 1 (rather than expm1) is used because it is the
    # universally supported Mosaic lowering; the cancellation error near 0 is <= ~1.2e-7
    # absolute, far below the test tolerance.
    return jnp.where(v > 0, v, jnp.exp(v) - 1.0)


def valuenet_kernel(x_ref, w1_ref, b1_ref, w2_ref, b2_ref, w3_ref, b3_ref, o_ref):
    x = x_ref[...]                                                       # (TB, 384) bf16
    # fc1 on the MXU, f32 accumulation; bias + ELU in f32.
    h1 = jnp.dot(x, w1_ref[...], preferred_element_type=jnp.float32)    # (TB, 256) f32
    h1 = _elu(h1 + b1_ref[...])
    # fc2 on the MXU (activations cast to bf16 only for the matmul input).
    h2 = jnp.dot(h1.astype(jnp.bfloat16), w2_ref[...],
                 preferred_element_type=jnp.float32)                    # (TB, 128) f32
    h2 = _elu(h2 + b2_ref[...])
    # fc3 (N=1): VPU multiply + cross-lane (XLU) reduction; padded lanes contribute 0.
    h3 = jnp.sum(h2 * w3_ref[...], axis=-1, keepdims=True)              # (TB, 1) f32
    o_ref[...] = jnp.tanh(h3 + b3_ref[...])


def _round_up(n, m):
    return ((n + m - 1) // m) * m


@functools.partial(jax.jit, static_argnames=("block_rows",))
def valuenet_forward(x, params, *, block_rows=512):
    """x: [B, 384] float32; params: packed kernel params (see pack_params)."""
    B = x.shape[0]
    # Batch tile: multiple of 256 (MXU height), default 512, never larger than needed.
    tb = max(256, min(_round_up(block_rows, 256), _round_up(B, 256)))
    b_pad = _round_up(B, tb)
    if b_pad != B:
        x = jnp.pad(x, ((0, b_pad - B), (0, 0)))
    # bf16 halves the HBM-bound x stream into the kernel (in a real pipeline the
    # bitboards would already be materialised in bf16).
    x = x.astype(jnp.bfloat16)

    grid = (b_pad // tb,)
    out = pl.pallas_call(
        valuenet_kernel,
        out_shape=jax.ShapeDtypeStruct((b_pad, OUT_DIM), jnp.float32),
        grid=grid,
        in_specs=[
            # batch-tiled activation stream (double-buffered by Pallas)
            pl.BlockSpec((tb, IN_DIM), lambda i: (i, 0)),
            # weights / biases: constant block index -> stay resident in VMEM
            pl.BlockSpec((IN_DIM, H1_DIM), lambda i: (0, 0)),
            pl.BlockSpec((1, H1_DIM), lambda i: (0, 0)),
            pl.BlockSpec((H1_DIM, H2_PAD), lambda i: (0, 0)),
            pl.BlockSpec((1, H2_PAD), lambda i: (0, 0)),
            pl.BlockSpec((1, H2_PAD), lambda i: (0, 0)),
            pl.BlockSpec((1, 1), lambda i: (0, 0)),
        ],
        out_specs=pl.BlockSpec((tb, OUT_DIM), lambda i: (i, 0)),
        compiler_params=pltpu.CompilerParams(
            dimension_semantics=("parallel",)),  # v7x: shard batch tiles across both TCs
    )(x, params["w1"], params["b1"], params["w2"], params["b2"],
      params["w3"], params["b3"])
    return out[:B]


def init_params(key):
    """nn.Linear-style init (uniform +/- 1/sqrt(fan_in)); f32, weights as [in, out]."""
    ks = jax.random.split(key, 6)

    def lin(kw, kb, fan_in, fan_out):
        bound = 1.0 / (fan_in ** 0.5)
        w = jax.random.uniform(kw, (fan_in, fan_out), jnp.float32, -bound, bound)
        b = jax.random.uniform(kb, (1, fan_out), jnp.float32, -bound, bound)
        return w, b

    w1, b1 = lin(ks[0], ks[1], IN_DIM, H1_DIM)
    w2, b2 = lin(ks[2], ks[3], H1_DIM, H2_DIM)
    w3, b3 = lin(ks[4], ks[5], H2_DIM, OUT_DIM)
    return {"w1": w1, "b1": b1, "w2": w2, "b2": b2, "w3": w3, "b3": b3}


def pack_params(p):
    """Kernel-layout params: bf16 matmul weights; fc2 output / fc3 input padded 64 -> 128."""
    pad = H2_PAD - H2_DIM
    return {
        "w1": p["w1"].astype(jnp.bfloat16),                                # (384, 256) bf16
        "b1": p["b1"],                                                     # (1, 256)   f32
        "w2": jnp.pad(p["w2"], ((0, 0), (0, pad))).astype(jnp.bfloat16),   # (256, 128) bf16
        "b2": jnp.pad(p["b2"], ((0, 0), (0, pad))),                        # (1, 128)   f32
        "w3": jnp.pad(p["w3"].reshape(1, H2_DIM), ((0, 0), (0, pad))),     # (1, 128)   f32
        "b3": p["b3"].reshape(1, 1),                                       # (1, 1)     f32
    }


def reference_forward_f32(x, p):
    """Pure-f32 JAX reference matching the PyTorch forward_pass exactly."""
    h1 = _elu(x @ p["w1"] + p["b1"])
    h2 = _elu(h1 @ p["w2"] + p["b2"])
    return jnp.tanh(h2 @ p["w3"] + p["b3"])


def reference_forward_kernel_numerics(x, kp):
    """Mirrors the kernel's bf16-matmul / f32-activation numerics (no Pallas)."""
    h1 = jnp.dot(x.astype(jnp.bfloat16), kp["w1"],
                 preferred_element_type=jnp.float32) + kp["b1"]
    h1 = _elu(h1)
    h2 = jnp.dot(h1.astype(jnp.bfloat16), kp["w2"],
                 preferred_element_type=jnp.float32) + kp["b2"]
    h2 = _elu(h2)
    h3 = jnp.sum(h2 * kp["w3"], axis=-1, keepdims=True) + kp["b3"]
    return jnp.tanh(h3)


if __name__ == "__main__":
    key = jax.random.PRNGKey(0)
    k_param, k_x = jax.random.split(key)
    params_f32 = init_params(k_param)
    params = pack_params(params_f32)

    # Synthetic batch of flattened "continous" bitboards (values in +/-{1.2 .. 0.2}),
    # shape [B, 6*8*8] = [8, 384].
    # TODO(synk): fen_to_small_bitboard_vector (python-chess FEN parsing) is host-side
    # Python, not a tensor op; it is replaced by a synthetic input here.
    B = 8
    x = jax.random.uniform(k_x, (B, IN_DIM), jnp.float32, -1.2, 1.2)

    out = jax.block_until_ready(valuenet_forward(x, params))
    assert out.shape == (B, OUT_DIM)

    ref_bf16 = reference_forward_kernel_numerics(x, params)   # same numerics as kernel
    ref_f32 = reference_forward_f32(x, params_f32)            # torch-equivalent f32 math
    assert jnp.allclose(out, ref_bf16, atol=1e-3), "mismatch vs bf16 JAX reference"
    assert jnp.allclose(out, ref_f32, atol=3e-2), "mismatch vs f32 JAX reference"

    print("KERNEL_OK")
</pallas_src>

<mosaic_0001>
module attributes {stable_mosaic.version = 11 : i64} {
  func.func @valuenet_kernel(%arg0: i32, %arg1: memref<256x384xbf16, #tpu.memory_space<vmem>>, %arg2: memref<384x256xbf16, #tpu.memory_space<vmem>>, %arg3: memref<1x256xf32, #tpu.memory_space<vmem>>, %arg4: memref<256x128xbf16, #tpu.memory_space<vmem>>, %arg5: memref<1x128xf32, #tpu.memory_space<vmem>>, %arg6: memref<1x128xf32, #tpu.memory_space<vmem>>, %arg7: memref<1x1xf32, #tpu.memory_space<vmem>>, %arg8: memref<256x1xf32, #tpu.memory_space<vmem>>) attributes {dimension_semantics = [#tpu.dimension_semantics<parallel>], iteration_bounds = array<i64: 1>, scalar_prefetch = 0 : i64, scratch_operands = 0 : i64, tpu.core_type = #tpu.core_type<tc>, window_params = [{transform_indices = @transform_0, window_bounds = array<i64: 256, 384>}, {pipeline_mode = #tpu.pipeline_mode<synchronous>, transform_indices = @transform_1, window_bounds = array<i64: 384, 256>}, {pipeline_mode = #tpu.pipeline_mode<synchronous>, transform_indices = @transform_2, window_bounds = array<i64: 1, 256>}, {pipeline_mode = #tpu.pipeline_mode<synchronous>, transform_indices = @transform_3, window_bounds = array<i64: 256, 128>}, {pipeline_mode = #tpu.pipeline_mode<synchronous>, transform_indices = @transform_4, window_bounds = array<i64: 1, 128>}, {pipeline_mode = #tpu.pipeline_mode<synchronous>, transform_indices = @transform_5, window_bounds = array<i64: 1, 128>}, {pipeline_mode = #tpu.pipeline_mode<synchronous>, transform_indices = @transform_6, window_bounds = array<i64: 1, 1>}, {transform_indices = @transform_7, window_bounds = array<i64: 256, 1>}]} {
    %c0 = arith.constant 0 : index
    %c0_0 = arith.constant 0 : index
    %0 = vector.load %arg1[%c0, %c0_0] : memref<256x384xbf16, #tpu.memory_space<vmem>>, vector<256x384xbf16>
    %c0_1 = arith.constant 0 : index
    %c0_2 = arith.constant 0 : index
    %1 = vector.load %arg2[%c0_1, %c0_2] : memref<384x256xbf16, #tpu.memory_space<vmem>>, vector<384x256xbf16>
    %cst = arith.constant dense<0.000000e+00> : vector<256x256xf32>
    %2 = tpu.matmul %0, %1, %cst {dimension_numbers = #tpu.dot_dimension_numbers<[1], [0], [0], [1], [0, 0, 1, 1], [], []>} : vector<256x384xbf16>, vector<384x256xbf16>, vector<256x256xf32> -> vector<256x256xf32>
    %c0_3 = arith.constant 0 : index
    %c0_4 = arith.constant 0 : index
    %3 = vector.load %arg3[%c0_3, %c0_4] : memref<1x256xf32, #tpu.memory_space<vmem>>, vector<1x256xf32>
    %4 = vector.broadcast %3 : vector<1x256xf32> to vector<256x256xf32>
    %5 = arith.addf %2, %4 : vector<256x256xf32>
    %cst_5 = arith.constant 0.000000e+00 : f32
    %6 = vector.broadcast %cst_5 : f32 to vector<256x256xf32>
    %7 = arith.cmpf ogt, %5, %6 : vector<256x256xf32>
    %8 = math.exp %5 : vector<256x256xf32>
    %cst_6 = arith.constant 1.000000e+00 : f32
    %9 = vector.broadcast %cst_6 : f32 to vector<256x256xf32>
    %10 = arith.subf %8, %9 : vector<256x256xf32>
    %11 = arith.select %7, %5, %10 : vector<256x256xi1>, vector<256x256xf32>
    %12 = arith.truncf %11 : vector<256x256xf32> to vector<256x256xbf16>
    %c0_7 = arith.constant 0 : index
    %c0_8 = arith.constant 0 : index
    %13 = vector.load %arg4[%c0_7, %c0_8] : memref<256x128xbf16, #tpu.memory_space<vmem>>, vector<256x128xbf16>
    %cst_9 = arith.constant dense<0.000000e+00> : vector<256x128xf32>
    %14 = tpu.matmul %12, %13, %cst_9 {dimension_numbers = #tpu.dot_dimension_numbers<[1], [0], [0], [1], [0, 0, 1, 1], [], []>} : vector<256x256xbf16>, vector<256x128xbf16>, vector<256x128xf32> -> vector<256x128xf32>
    %c0_10 = arith.constant 0 : index
    %c0_11 = arith.constant 0 : index
    %15 = vector.load %arg5[%c0_10, %c0_11] : memref<1x128xf32, #tpu.memory_space<vmem>>, vector<1x128xf32>
    %16 = vector.broadcast %15 : vector<1x128xf32> to vector<256x128xf32>
    %17 = arith.addf %14, %16 : vector<256x128xf32>
    %cst_12 = arith.constant 0.000000e+00 : f32
    %18 = vector.broadcast %cst_12 : f32 to vector<256x128xf32>
    %19 = arith.cmpf ogt, %17, %18 : vector<256x128xf32>
    %20 = math.exp %17 : vector<256x128xf32>
    %cst_13 = arith.constant 1.000000e+00 : f32
    %21 = vector.broadcast %cst_13 : f32 to vector<256x128xf32>
    %22 = arith.subf %20, %21 : vector<256x128xf32>
    %23 = arith.select %19, %17, %22 : vector<256x128xi1>, vector<256x128xf32>
    %c0_14 = arith.constant 0 : index
    %c0_15 = arith.constant 0 : index
    %24 = vector.load %arg6[%c0_14, %c0_15] : memref<1x128xf32, #tpu.memory_space<vmem>>, vector<1x128xf32>
    %25 = vector.broadcast %24 : vector<1x128xf32> to vector<256x128xf32>
    %26 = arith.mulf %23, %25 : vector<256x128xf32>
    %cst_16 = arith.constant dense<0.000000e+00> : vector<256xf32>
    %27 = vector.multi_reduction <add>, %26, %cst_16 [1] : vector<256x128xf32> to vector<256xf32>
    %28 = vector.shape_cast %27 : vector<256xf32> to vector<256x1xf32>
    %c0_17 = arith.constant 0 : index
    %c0_18 = arith.constant 0 : index
    %29 = vector.load %arg7[%c0_17, %c0_18] : memref<1x1xf32, #tpu.memory_space<vmem>>, vector<1x1xf32>
    %30 = vector.broadcast %29 : vector<1x1xf32> to vector<256x1xf32>
    %31 = arith.addf %28, %30 : vector<256x1xf32>
    %32 = math.tanh %31 : vector<256x1xf32>
    %c0_19 = arith.constant 0 : index
    %c0_20 = arith.constant 0 : index
    %33 = vector.load %arg8[%c0_19, %c0_20] : memref<256x1xf32, #tpu.memory_space<vmem>>, vector<256x1xf32>
    tpu.vector_store %arg8[%c0_19, %c0_20], %32 {strides = array<i32>} : memref<256x1xf32, #tpu.memory_space<vmem>>, vector<256x1xf32>,
    return
  }
  func.func @transform_0(%arg0: i32) -> (i32, i32) {
    %c0_i32 = arith.constant 0 : i32
    %c0_i32_0 = arith.constant 0 : i32
    return %arg0, %c0_i32 : i32, i32
  }
  func.func @transform_1(%arg0: i32) -> (i32, i32) {
    %c0_i32 = arith.constant 0 : i32
    %c0_i32_0 = arith.constant 0 : i32
    %c0_i32_1 = arith.constant 0 : i32
    return %c0_i32, %c0_i32_0 : i32, i32
  }
  func.func @transform_2(%arg0: i32) -> (i32, i32) {
    %c0_i32 = arith.constant 0 : i32
    %c0_i32_0 = arith.constant 0 : i32
    %c0_i32_1 = arith.constant 0 : i32
    return %c0_i32, %c0_i32_0 : i32, i32
  }
  func.func @transform_3(%arg0: i32) -> (i32, i32) {
    %c0_i32 = arith.constant 0 : i32
    %c0_i32_0 = arith.constant 0 : i32
    %c0_i32_1 = arith.constant 0 : i32
    return %c0_i32, %c0_i32_0 : i32, i32
  }
  func.func @transform_4(%arg0: i32) -> (i32, i32) {
    %c0_i32 = arith.constant 0 : i32
    %c0_i32_0 = arith.constant 0 : i32
    %c0_i32_1 = arith.constant 0 : i32
    return %c0_i32, %c0_i32_0 : i32, i32
  }
  func.func @transform_5(%arg0: i32) -> (i32, i32) {
    %c0_i32 = arith.constant 0 : i32
    %c0_i32_0 = arith.constant 0 : i32
    %c0_i32_1 = arith.constant 0 : i32
    return %c0_i32, %c0_i32_0 : i32, i32
  }
  func.func @transform_6(%arg0: i32) -> (i32, i32) {
    %c0_i32 = arith.constant 0 : i32
    %c0_i32_0 = arith.constant 0 : i32
    %c0_i32_1 = arith.constant 0 : i32
    return %c0_i32, %c0_i32_0 : i32, i32
  }
  func.func @transform_7(%arg0: i32) -> (i32, i32) {
    %c0_i32 = arith.constant 0 : i32
    %c0_i32_0 = arith.constant 0 : i32
    return %arg0, %c0_i32 : i32, i32
  }
}

</mosaic_0001>

<llo_original>
// kernel: valuenet_forward.1
$region0: #{valuenet_forward.1}
  #allocation0 [shape = 'u32[]', space=smem, size = 0x4, offset = 0x4, fixed_abs, tag = 'smem constant byte address 0x4 - core index']
  #allocation1 [shape = 'u32[144,128]{1,0:T(1,128)}', space=vmem, size = 0x12000, scoped, tag = 'internal scratch']
  #allocation2 [shape = 'f32[1,1]{1,0:T(1,128)S(1)}', space=vmem, size = 0x200, scoped, tag = 'scoped memory for valuenet_forward.1']
  %s0 = inlined_call_operand.vmem [shape: bf16[256,384], index: 0, kind: input, shape index: {}]
  %s1 = inlined_call_operand.vmem [shape: bf16[384,256], index: 1, kind: input, shape index: {}]
  %s2 = inlined_call_operand.vmem [shape: f32[1,256], index: 2, kind: input, shape index: {}]
  %s3 = inlined_call_operand.hbm [shape: bf16[256,128], index: 3, kind: input, shape index: {}]
  %s4 = inlined_call_operand.vmem [shape: f32[1,128], index: 4, kind: input, shape index: {}]
  %s5 = inlined_call_operand.vmem [shape: f32[1,128], index: 5, kind: input, shape index: {}]
  %s6 = inlined_call_operand.<no memory space> [shape: f32[1,1], index: 6, kind: input, shape index: {}]
  %s7 = inlined_call_operand.vmem [shape: f32[256,1], index: 7, kind: output, shape index: {}]
  %s8 = sld [smem:[#allocation0]]
  $region42: #{valuenet_forward.1} parent=0
    _
  %s10 = ssub.s32 1, %s8
  %s11 = scalar_select 0, %s10, %s8
  %v12 = vstv %s6
  %13 = vst [vmem:[#allocation2] sm:$0x1] %v12
  $region1: #{valuenet_forward.1} parent=0
    #allocation3 [shape = 'u8[65536]{0}', space=vmem, size = 0x10000, scoped, tag = 'input window, operand 3, single buffered']
    #allocation4 [shape = 's32[1]{0}', space=sflag, size = 0x4, scoped, tag = 'scoped memory for valuenet_forward.1']
    %14 = vsyncpa [#allocation4], 0
    // Predicated region
    $region2: #{valuenet_forward.1} parent=1 // pred_check
      _
    $region3: #{valuenet_forward.1} parent=1 // pred_check_branch
      %16 = sbr.rel (0) target = $region5
    $region4: #{valuenet_forward.1} parent=1 // pred_region
      _
    $region5: #{valuenet_forward.1} parent=1 // pred_fallthru
      _
    // Predicated region
    $region6: #{valuenet_forward.1} parent=1 // pred_check
      _
    $region7: #{valuenet_forward.1} parent=1 // pred_check_branch
      %18 = sbr.rel (0) target = $region9
    $region8: #{valuenet_forward.1} parent=1 // pred_region
      _
    $region9: #{valuenet_forward.1} parent=1 // pred_fallthru
      _
    // Predicated region
    $region10: #{valuenet_forward.1} parent=1 // pred_check
      _
    $region11: #{valuenet_forward.1} parent=1 // pred_check_branch
      %20 = sbr.rel (0) target = $region13
    $region12: #{valuenet_forward.1} parent=1 // pred_region
      _
    $region13: #{valuenet_forward.1} parent=1 // pred_fallthru
      _
    // Predicated region
    $region14: #{valuenet_forward.1} parent=1 // pred_check
      _
    $region15: #{valuenet_forward.1} parent=1 // pred_check_branch
      %22 = sbr.rel (0) target = $region17
    $region16: #{valuenet_forward.1} parent=1 // pred_region
      %s24 = ssub.s32 2048, 2048
      %25 = vsyncadd [#allocation4], %s24
      %s26 = sshll.u32 [#allocation3], 4
      %s27 = int_to_ptr.vmem [resolvable:$true] %s26
      %32 = dma.hbm_to_vmem [thread:$0]  %s3, 2048, %s27, [#allocation4], 64, 64, 4
    $region17: #{valuenet_forward.1} parent=1 // pred_fallthru
      _
    // Predicated region
    $region18: #{valuenet_forward.1} parent=1 // pred_check
      _
    $region19: #{valuenet_forward.1} parent=1 // pred_check_branch
      %34 = sbr.rel (0) target = $region21
    $region20: #{valuenet_forward.1} parent=1 // pred_region
      _
    $region21: #{valuenet_forward.1} parent=1 // pred_fallthru
      _
    // Predicated region
    $region22: #{valuenet_forward.1} parent=1 // pred_check
      _
    $region23: #{valuenet_forward.1} parent=1 // pred_check_branch
      %36 = sbr.rel (0) target = $region25
    $region24: #{valuenet_forward.1} parent=1 // pred_region
      _
    $region25: #{valuenet_forward.1} parent=1 // pred_fallthru
      _
    // Predicated region
    $region26: #{valuenet_forward.1} parent=1 // pred_check
      _
    $region27: #{valuenet_forward.1} parent=1 // pred_check_branch
      %38 = sbr.rel (0) target = $region29
    $region28: #{valuenet_forward.1} parent=1 // pred_region
      _
    $region29: #{valuenet_forward.1} parent=1 // pred_fallthru
      _
    // Predicated region
    $region30: #{valuenet_forward.1} parent=1 // pred_check
      _
    $region31: #{valuenet_forward.1} parent=1 // pred_check_branch
      %40 = sbr.rel (0) target = $region33
    $region32: #{valuenet_forward.1} parent=1 // pred_region
      %41 = dma.done [#allocation4], 2048
    $region33: #{valuenet_forward.1} parent=1 // pred_fallthru
      _
    %v43 = vld [vmem:[%s0] sm:$0xff]
    %v44 = vld [vmem:[%s0 + $0x8] sm:$0xf]
    %v45 = vld [vmem:[%s0 + $0xc] sm:$0xff]
    %v46 = vld [vmem:[%s0 + $0x14] sm:$0xf]
    %v47 = vld [vmem:[%s0 + $0x18] sm:$0xff]
    %v48 = vld [vmem:[%s0 + $0x20] sm:$0xf]
    %v49 = vld [vmem:[%s0 + $0x24] sm:$0xff]
    %v50 = vld [vmem:[%s0 + $0x2c] sm:$0xf]
    %v51 = vld [vmem:[%s0 + $0x30] sm:$0xff]
    %v52 = vld [vmem:[%s0 + $0x38] sm:$0xf]
    %v53 = vld [vmem:[%s0 + $0x3c] sm:$0xff]
    %v54 = vld [vmem:[%s0 + $0x44] sm:$0xf]
    %v55 = vld [vmem:[%s0 + $0x48] sm:$0xff]
    %v56 = vld [vmem:[%s0 + $0x50] sm:$0xf]
    %v57 = vld [vmem:[%s0 + $0x54] sm:$0xff]
    %v58 = vld [vmem:[%s0 + $0x5c] sm:$0xf]
    %v59 = vld [vmem:[%s0 + $0x60] sm:$0xff]
    %v60 = vld [vmem:[%s0 + $0x68] sm:$0xf]
    %v61 = vld [vmem:[%s0 + $0x6c] sm:$0xff]
    %v62 = vld [vmem:[%s0 + $0x74] sm:$0xf]
    %v63 = vld [vmem:[%s0 + $0x78] sm:$0xff]
    %v64 = vld [vmem:[%s0 + $0x80] sm:$0xf]
    %v65 = vld [vmem:[%s0 + $0x84] sm:$0xff]
    %v66 = vld [vmem:[%s0 + $0x8c] sm:$0xf]
    %v67 = vld [vmem:[%s0 + $0x90] sm:$0xff]
    %v68 = vld [vmem:[%s0 + $0x98] sm:$0xf]
    %v69 = vld [vmem:[%s0 + $0x9c] sm:$0xff]
    %v70 = vld [vmem:[%s0 + $0xa4] sm:$0xf]
    %v71 = vld [vmem:[%s0 + $0xa8] sm:$0xff]
    %v72 = vld [vmem:[%s0 + $0xb0] sm:$0xf]
    %v73 = vld [vmem:[%s0 + $0xb4] sm:$0xff]
    %v74 = vld [vmem:[%s0 + $0xbc] sm:$0xf]
    %v75 = vld [vmem:[%s0 + $0xc0] sm:$0xff]
    %v76 = vld [vmem:[%s0 + $0xc8] sm:$0xf]
    %v77 = vld [vmem:[%s0 + $0xcc] sm:$0xff]
    %v78 = vld [vmem:[%s0 + $0xd4] sm:$0xf]
    %v79 = vld [vmem:[%s0 + $0xd8] sm:$0xff]
    %v80 = vld [vmem:[%s0 + $0xe0] sm:$0xf]
    %v81 = vld [vmem:[%s0 + $0xe4] sm:$0xff]
    %v82 = vld [vmem:[%s0 + $0xec] sm:$0xf]
    %v83 = vld [vmem:[%s0 + $0xf0] sm:$0xff]
    %v84 = vld [vmem:[%s0 + $0xf8] sm:$0xf]
    %v85 = vld [vmem:[%s0 + $0xfc] sm:$0xff]
    %v86 = vld [vmem:[%s0 + $0x104] sm:$0xf]
    %v87 = vld [vmem:[%s0 + $0x108] sm:$0xff]
    %v88 = vld [vmem:[%s0 + $0x110] sm:$0xf]
    %v89 = vld [vmem:[%s0 + $0x114] sm:$0xff]
    %v90 = vld [vmem:[%s0 + $0x11c] sm:$0xf]
    %v91 = vld [vmem:[%s0 + $0x120] sm:$0xff]
    %v92 = vld [vmem:[%s0 + $0x128] sm:$0xf]
    %v93 = vld [vmem:[%s0 + $0x12c] sm:$0xff]
    %v94 = vld [vmem:[%s0 + $0x134] sm:$0xf]
    %v95 = vld [vmem:[%s0 + $0x138] sm:$0xff]
    %v96 = vld [vmem:[%s0 + $0x140] sm:$0xf]
    %v97 = vld [vmem:[%s0 + $0x144] sm:$0xff]
    %v98 = vld [vmem:[%s0 + $0x14c] sm:$0xf]
    %v99 = vld [vmem:[%s0 + $0x150] sm:$0xff]
    %v100 = vld [vmem:[%s0 + $0x158] sm:$0xf]
    %v101 = vld [vmem:[%s0 + $0x15c] sm:$0xff]
    %v102 = vld [vmem:[%s0 + $0x164] sm:$0xf]
    %v103 = vld [vmem:[%s0 + $0x168] sm:$0xff]
    %v104 = vld [vmem:[%s0 + $0x170] sm:$0xf]
    %v105 = vld [vmem:[%s0 + $0x174] sm:$0xff]
    %v106 = vld [vmem:[%s0 + $0x17c] sm:$0xf]
    %v107 = vld [vmem:[%s1] sm:$0xff]
    %v108 = vld [vmem:[%s1 + $0x8] sm:$0xff]
    %v109 = vld [vmem:[%s1 + $0x10] sm:$0xff]
    %v110 = vld [vmem:[%s1 + $0x18] sm:$0xff]
    %v111 = vld [vmem:[%s1 + $0x20] sm:$0xff]
    %v112 = vld [vmem:[%s1 + $0x28] sm:$0xff]
    %v113 = vld [vmem:[%s1 + $0x30] sm:$0xff]
    %v114 = vld [vmem:[%s1 + $0x38] sm:$0xff]
    %v115 = vld [vmem:[%s1 + $0x40] sm:$0xff]
    %v116 = vld [vmem:[%s1 + $0x48] sm:$0xff]
    %v117 = vld [vmem:[%s1 + $0x50] sm:$0xff]
    %v118 = vld [vmem:[%s1 + $0x58] sm:$0xff]
    %v119 = vld [vmem:[%s1 + $0x60] sm:$0xff]
    %v120 = vld [vmem:[%s1 + $0x68] sm:$0xff]
    %v121 = vld [vmem:[%s1 + $0x70] sm:$0xff]
    %v122 = vld [vmem:[%s1 + $0x78] sm:$0xff]
    %v123 = vld [vmem:[%s1 + $0x80] sm:$0xff]
    %v124 = vld [vmem:[%s1 + $0x88] sm:$0xff]
    %v125 = vld [vmem:[%s1 + $0x90] sm:$0xff]
    %v126 = vld [vmem:[%s1 + $0x98] sm:$0xff]
    %v127 = vld [vmem:[%s1 + $0xa0] sm:$0xff]
    %v128 = vld [vmem:[%s1 + $0xa8] sm:$0xff]
    %v129 = vld [vmem:[%s1 + $0xb0] sm:$0xff]
    %v130 = vld [vmem:[%s1 + $0xb8] sm:$0xff]
    %v131 = vld [vmem:[%s1 + $0xc0] sm:$0xff]
    %v132 = vld [vmem:[%s1 + $0xc8] sm:$0xff]
    %v133 = vld [vmem:[%s1 + $0xd0] sm:$0xff]
    %v134 = vld [vmem:[%s1 + $0xd8] sm:$0xff]
    %v135 = vld [vmem:[%s1 + $0xe0] sm:$0xff]
    %v136 = vld [vmem:[%s1 + $0xe8] sm:$0xff]
    %v137 = vld [vmem:[%s1 + $0xf0] sm:$0xff]
    %v138 = vld [vmem:[%s1 + $0xf8] sm:$0xff]
    %v139 = vld [vmem:[%s1 + $0x100] sm:$0xff]
    %v140 = vld [vmem:[%s1 + $0x108] sm:$0xff]
    %v141 = vld [vmem:[%s1 + $0x110] sm:$0xff]
    %v142 = vld [vmem:[%s1 + $0x118] sm:$0xff]
    %v143 = vld [vmem:[%s1 + $0x120] sm:$0xff]
    %v144 = vld [vmem:[%s1 + $0x128] sm:$0xff]
    %v145 = vld [vmem:[%s1 + $0x130] sm:$0xff]
    %v146 = vld [vmem:[%s1 + $0x138] sm:$0xff]
    %v147 = vld [vmem:[%s1 + $0x140] sm:$0xff]
    %v148 = vld [vmem:[%s1 + $0x148] sm:$0xff]
    %v149 = vld [vmem:[%s1 + $0x150] sm:$0xff]
    %v150 = vld [vmem:[%s1 + $0x158] sm:$0xff]
    %v151 = vld [vmem:[%s1 + $0x160] sm:$0xff]
    %v152 = vld [vmem:[%s1 + $0x168] sm:$0xff]
    %v153 = vld [vmem:[%s1 + $0x170] sm:$0xff]
    %v154 = vld [vmem:[%s1 + $0x178] sm:$0xff]
    %v155 = vld [vmem:[%s2] sm:$0x3]
    %v157 = vlaneseq
    %v158 = vshrl.u32 %v157, 7
    %v159 = vsub.s32 0, %v158
    %v160 = vrot.slane %v155, %v159
    %v161 = vlaneseq
    %v162 = vshrl.u32 %v161, 7
    %v163 = vsub.s32 1, %v162
    %v164 = vrot.slane %v155, %v163
    %v231 = vunpack.c.l.b16 %v43
    %v232 = vunpack.c.h.b16 %v43
    %v233 = vunpack.c.l.b16 %v44
    %v234 = vunpack.c.l.b16 %v45
    %v235 = vunpack.c.h.b16 %v45
    %v236 = vunpack.c.l.b16 %v46
    %v237 = vunpack.c.l.b16 %v47
    %v238 = vunpack.c.h.b16 %v47
    %v239 = vunpack.c.l.b16 %v48
    %v240 = vunpack.c.l.b16 %v49
    %v241 = vunpack.c.h.b16 %v49
    %v242 = vunpack.c.l.b16 %v50
    %v243 = vunpack.c.l.b16 %v51
    %v244 = vunpack.c.h.b16 %v51
    %v245 = vunpack.c.l.b16 %v52
    %v246 = vunpack.c.l.b16 %v53
    %v247 = vunpack.c.h.b16 %v53
    %v248 = vunpack.c.l.b16 %v54
    %v249 = vunpack.c.l.b16 %v55
    %v250 = vunpack.c.h.b16 %v55
    %v251 = vunpack.c.l.b16 %v56
    %v252 = vunpack.c.l.b16 %v57
    %v253 = vunpack.c.h.b16 %v57
    %v254 = vunpack.c.l.b16 %v58
    %v255 = vunpack.c.l.b16 %v59
    %v256 = vunpack.c.h.b16 %v59
    %v257 = vunpack.c.l.b16 %v60
    %v258 = vunpack.c.l.b16 %v61
    %v259 = vunpack.c.h.b16 %v61
    %v260 = vunpack.c.l.b16 %v62
    %v261 = vunpack.c.l.b16 %v63
    %v262 = vunpack.c.h.b16 %v63
    %v263 = vunpack.c.l.b16 %v64
    %v264 = vunpack.c.l.b16 %v65
    %v265 = vunpack.c.h.b16 %v65
    %v266 = vunpack.c.l.b16 %v66
    %v267 = vunpack.c.l.b16 %v67
    %v268 = vunpack.c.h.b16 %v67
    %v269 = vunpack.c.l.b16 %v68
    %v270 = vunpack.c.l.b16 %v69
    %v271 = vunpack.c.h.b16 %v69
    %v272 = vunpack.c.l.b16 %v70
    %v273 = vunpack.c.l.b16 %v71
    %v274 = vunpack.c.h.b16 %v71
    %v275 = vunpack.c.l.b16 %v72
    %v276 = vunpack.c.l.b16 %v73
    %v277 = vunpack.c.h.b16 %v73
    %v278 = vunpack.c.l.b16 %v74
    %v279 = vunpack.c.l.b16 %v75
    %v280 = vunpack.c.h.b16 %v75
    %v281 = vunpack.c.l.b16 %v76
    %v282 = vunpack.c.l.b16 %v77
    %v283 = vunpack.c.h.b16 %v77
    %v284 = vunpack.c.l.b16 %v78
    %v285 = vunpack.c.l.b16 %v79
    %v286 = vunpack.c.h.b16 %v79
    %v287 = vunpack.c.l.b16 %v80
    %v288 = vunpack.c.l.b16 %v81
    %v289 = vunpack.c.h.b16 %v81
    %v290 = vunpack.c.l.b16 %v82
    %v291 = vunpack.c.l.b16 %v83
    %v292 = vunpack.c.h.b16 %v83
    %v293 = vunpack.c.l.b16 %v84
    %v294 = vunpack.c.l.b16 %v85
    %v295 = vunpack.c.h.b16 %v85
    %v296 = vunpack.c.l.b16 %v86
    %v297 = vunpack.c.l.b16 %v87
    %v298 = vunpack.c.h.b16 %v87
    %v299 = vunpack.c.l.b16 %v88
    %v300 = vunpack.c.l.b16 %v89
    %v301 = vunpack.c.h.b16 %v89
    %v302 = vunpack.c.l.b16 %v90
    %v303 = vunpack.c.l.b16 %v91
    %v304 = vunpack.c.h.b16 %v91
    %v305 = vunpack.c.l.b16 %v92
    %v306 = vunpack.c.l.b16 %v93
    %v307 = vunpack.c.h.b16 %v93
    %v308 = vunpack.c.l.b16 %v94
    %v309 = vunpack.c.l.b16 %v95
    %v310 = vunpack.c.h.b16 %v95
    %v311 = vunpack.c.l.b16 %v96
    %v312 = vunpack.c.l.b16 %v97
    %v313 = vunpack.c.h.b16 %v97
    %v314 = vunpack.c.l.b16 %v98
    %v315 = vunpack.c.l.b16 %v99
    %v316 = vunpack.c.h.b16 %v99
    %v317 = vunpack.c.l.b16 %v100
    %v318 = vunpack.c.l.b16 %v101
    %v319 = vunpack.c.h.b16 %v101
    %v320 = vunpack.c.l.b16 %v102
    %v321 = vunpack.c.l.b16 %v103
    %v322 = vunpack.c.h.b16 %v103
    %v323 = vunpack.c.l.b16 %v104
    %v324 = vunpack.c.l.b16 %v105
    %v325 = vunpack.c.h.b16 %v105
    %v326 = vunpack.c.l.b16 %v106
    %v327 = vpack.c.b16 %v234, %v231
    %v328 = vpack.c.b16 %v235, %v232
    %v329 = vpack.c.b16 %v236, %v233
    %v330 = vpack.c.b16 %v240, %v237
    %v331 = vpack.c.b16 %v241, %v238
    %v332 = vpack.c.b16 %v242, %v239
    %v333 = vpack.c.b16 %v246, %v243
    %v334 = vpack.c.b16 %v247, %v244
    %v335 = vpack.c.b16 %v248, %v245
    %v336 = vpack.c.b16 %v252, %v249
    %v337 = vpack.c.b16 %v253, %v250
    %v338 = vpack.c.b16 %v254, %v251
    %v339 = vpack.c.b16 %v258, %v255
    %v340 = vpack.c.b16 %v259, %v256
    %v341 = vpack.c.b16 %v260, %v257
    %v342 = vpack.c.b16 %v264, %v261
    %v343 = vpack.c.b16 %v265, %v262
    %v344 = vpack.c.b16 %v266, %v263
    %v345 = vpack.c.b16 %v270, %v267
    %v346 = vpack.c.b16 %v271, %v268
    %v347 = vpack.c.b16 %v272, %v269
    %v348 = vpack.c.b16 %v276, %v273
    %v349 = vpack.c.b16 %v277, %v274
    %v350 = vpack.c.b16 %v278, %v275
    %v351 = vpack.c.b16 %v282, %v279
    %v352 = vpack.c.b16 %v283, %v280
    %v353 = vpack.c.b16 %v284, %v281
    %v354 = vpack.c.b16 %v288, %v285
    %v355 = vpack.c.b16 %v289, %v286
    %v356 = vpack.c.b16 %v290, %v287
    %v357 = vpack.c.b16 %v294, %v291
    %v358 = vpack.c.b16 %v295, %v292
    %v359 = vpack.c.b16 %v296, %v293
    %v360 = vpack.c.b16 %v300, %v297
    %v361 = vpack.c.b16 %v301, %v298
    %v362 = vpack.c.b16 %v302, %v299
    %v363 = vpack.c.b16 %v306, %v303
    %v364 = vpack.c.b16 %v307, %v304
    %v365 = vpack.c.b16 %v308, %v305
    %v366 = vpack.c.b16 %v312, %v309
    %v367 = vpack.c.b16 %v313, %v310
    %v368 = vpack.c.b16 %v314, %v311
    %v369 = vpack.c.b16 %v318, %v315
    %v370 = vpack.c.b16 %v319, %v316
    %v371 = vpack.c.b16 %v320, %v317
    %v372 = vpack.c.b16 %v324, %v321
    %v373 = vpack.c.b16 %v325, %v322
    %v374 = vpack.c.b16 %v326, %v323
    %v471 = vunpack.c.l.b16 %v107
    %v472 = vunpack.c.h.b16 %v107
    %v473 = vunpack.c.l.b16 %v108
    %v474 = vunpack.c.h.b16 %v108
    %v475 = vunpack.c.l.b16 %v109
    %v476 = vunpack.c.h.b16 %v109
    %v477 = vunpack.c.l.b16 %v110
    %v478 = vunpack.c.h.b16 %v110
    %v479 = vunpack.c.l.b16 %v111
    %v480 = vunpack.c.h.b16 %v111
    %v481 = vunpack.c.l.b16 %v112
    %v482 = vunpack.c.h.b16 %v112
    %v483 = vunpack.c.l.b16 %v113
    %v484 = vunpack.c.h.b16 %v113
    %v485 = vunpack.c.l.b16 %v114
    %v486 = vunpack.c.h.b16 %v114
    %v487 = vunpack.c.l.b16 %v115
    %v488 = vunpack.c.h.b16 %v115
    %v489 = vunpack.c.l.b16 %v116
    %v490 = vunpack.c.h.b16 %v116
    %v491 = vunpack.c.l.b16 %v117
    %v492 = vunpack.c.h.b16 %v117
    %v493 = vunpack.c.l.b16 %v118
    %v494 = vunpack.c.h.b16 %v118
    %v495 = vunpack.c.l.b16 %v119
    %v496 = vunpack.c.h.b16 %v119
    %v497 = vunpack.c.l.b16 %v120
    %v498 = vunpack.c.h.b16 %v120
    %v499 = vunpack.c.l.b16 %v121
    %v500 = vunpack.c.h.b16 %v121
    %v501 = vunpack.c.l.b16 %v122
    %v502 = vunpack.c.h.b16 %v122
    %v503 = vunpack.c.l.b16 %v123
    %v504 = vunpack.c.h.b16 %v123
    %v505 = vunpack.c.l.b16 %v124
    %v506 = vunpack.c.h.b16 %v124
    %v507 = vunpack.c.l.b16 %v125
    %v508 = vunpack.c.h.b16 %v125
    %v509 = vunpack.c.l.b16 %v126
    %v510 = vunpack.c.h.b16 %v126
    %v511 = vunpack.c.l.b16 %v127
    %v512 = vunpack.c.h.b16 %v127
    %v513 = vunpack.c.l.b16 %v128
    %v514 = vunpack.c.h.b16 %v128
    %v515 = vunpack.c.l.b16 %v129
    %v516 = vunpack.c.h.b16 %v129
    %v517 = vunpack.c.l.b16 %v130
    %v518 = vunpack.c.h.b16 %v130
    %v519 = vunpack.c.l.b16 %v131
    %v520 = vunpack.c.h.b16 %v131
    %v521 = vunpack.c.l.b16 %v132
    %v522 = vunpack.c.h.b16 %v132
    %v523 = vunpack.c.l.b16 %v133
    %v524 = vunpack.c.h.b16 %v133
    %v525 = vunpack.c.l.b16 %v134
    %v526 = vunpack.c.h.b16 %v134
    %v527 = vunpack.c.l.b16 %v135
    %v528 = vunpack.c.h.b16 %v135
    %v529 = vunpack.c.l.b16 %v136
    %v530 = vunpack.c.h.b16 %v136
    %v531 = vunpack.c.l.b16 %v137
    %v532 = vunpack.c.h.b16 %v137
    %v533 = vunpack.c.l.b16 %v138
    %v534 = vunpack.c.h.b16 %v138
    %v535 = vunpack.c.l.b16 %v139
    %v536 = vunpack.c.h.b16 %v139
    %v537 = vunpack.c.l.b16 %v140
    %v538 = vunpack.c.h.b16 %v140
    %v539 = vunpack.c.l.b16 %v141
    %v540 = vunpack.c.h.b16 %v141
    %v541 = vunpack.c.l.b16 %v142
    %v542 = vunpack.c.h.b16 %v142
    %v543 = vunpack.c.l.b16 %v143
    %v544 = vunpack.c.h.b16 %v143
    %v545 = vunpack.c.l.b16 %v144
    %v546 = vunpack.c.h.b16 %v144
    %v547 = vunpack.c.l.b16 %v145
    %v548 = vunpack.c.h.b16 %v145
    %v549 = vunpack.c.l.b16 %v146
    %v550 = vunpack.c.h.b16 %v146
    %v551 = vunpack.c.l.b16 %v147
    %v552 = vunpack.c.h.b16 %v147
    %v553 = vunpack.c.l.b16 %v148
    %v554 = vunpack.c.h.b16 %v148
    %v555 = vunpack.c.l.b16 %v149
    %v556 = vunpack.c.h.b16 %v149
    %v557 = vunpack.c.l.b16 %v150
    %v558 = vunpack.c.h.b16 %v150
    %v559 = vunpack.c.l.b16 %v151
    %v560 = vunpack.c.h.b16 %v151
    %v561 = vunpack.c.l.b16 %v152
    %v562 = vunpack.c.h.b16 %v152
    %v563 = vunpack.c.l.b16 %v153
    %v564 = vunpack.c.h.b16 %v153
    %v565 = vunpack.c.l.b16 %v154
    %v566 = vunpack.c.h.b16 %v154
    %v567 = vpack.c.b16 %v473, %v471
    %v568 = vpack.c.b16 %v474, %v472
    %v569 = vpack.c.b16 %v477, %v475
    %v570 = vpack.c.b16 %v478, %v476
    %v571 = vpack.c.b16 %v481, %v479
    %v572 = vpack.c.b16 %v482, %v480
    %v573 = vpack.c.b16 %v485, %v483
    %v574 = vpack.c.b16 %v486, %v484
    %v575 = vpack.c.b16 %v489, %v487
    %v576 = vpack.c.b16 %v490, %v488
    %v577 = vpack.c.b16 %v493, %v491
    %v578 = vpack.c.b16 %v494, %v492
    %v579 = vpack.c.b16 %v497, %v495
    %v580 = vpack.c.b16 %v498, %v496
    %v581 = vpack.c.b16 %v501, %v499
    %v582 = vpack.c.b16 %v502, %v500
    %v583 = vpack.c.b16 %v505, %v503
    %v584 = vpack.c.b16 %v506, %v504
    %v585 = vpack.c.b16 %v509, %v507
    %v586 = vpack.c.b16 %v510, %v508
    %v587 = vpack.c.b16 %v513, %v511
    %v588 = vpack.c.b16 %v514, %v512
    %v589 = vpack.c.b16 %v517, %v515
    %v590 = vpack.c.b16 %v518, %v516
    %v591 = vpack.c.b16 %v521, %v519
    %v592 = vpack.c.b16 %v522, %v520
    %v593 = vpack.c.b16 %v525, %v523
    %v594 = vpack.c.b16 %v526, %v524
    %v595 = vpack.c.b16 %v529, %v527
    %v596 = vpack.c.b16 %v530, %v528
    %v597 = vpack.c.b16 %v533, %v531
    %v598 = vpack.c.b16 %v534, %v532
    %v599 = vpack.c.b16 %v537, %v535
    %v600 = vpack.c.b16 %v538, %v536
    %v601 = vpack.c.b16 %v541, %v539
    %v602 = vpack.c.b16 %v542, %v540
    %v603 = vpack.c.b16 %v545, %v543
    %v604 = vpack.c.b16 %v546, %v544
    %v605 = vpack.c.b16 %v549, %v547
    %v606 = vpack.c.b16 %v550, %v548
    %v607 = vpack.c.b16 %v553, %v551
    %v608 = vpack.c.b16 %v554, %v552
    %v609 = vpack.c.b16 %v557, %v555
    %v610 = vpack.c.b16 %v558, %v556
    %v611 = vpack.c.b16 %v561, %v559
    %v612 = vpack.c.b16 %v562, %v560
    %v613 = vpack.c.b16 %v565, %v563
    %v614 = vpack.c.b16 %v566, %v564
    %663 = vmatprep.subr.bf16.mxu0 %v568
    %664 = vmatpush1.bf16.msra.mxu0 %v567
    %665 = vmatprep.subr.bf16.mxu0 %v570
    %666 = vmatpush1.bf16.msra.mxu0 %v569
    %667 = vmatprep.subr.bf16.mxu0 %v572
    %668 = vmatpush1.bf16.msra.mxu0 %v571
    %669 = vmatprep.subr.bf16.mxu0 %v574
    %670 = vmatpush1.bf16.msra.mxu0 %v573
    %671 = vmatprep.subr.bf16.mxu0 %v576
    %672 = vmatpush1.bf16.msra.mxu0 %v575
    %673 = vmatprep.subr.bf16.mxu0 %v578
    %674 = vmatpush1.bf16.msra.mxu0 %v577
    %675 = vmatprep.subr.bf16.mxu0 %v580
    %676 = vmatpush1.bf16.msra.mxu0 %v579
    %677 = vmatprep.subr.bf16.mxu0 %v582
    %678 = vmatpush1.bf16.msra.mxu0 %v581
    %679 = vmatprep.subr.bf16.mxu0 %v584
    %680 = vmatpush1.bf16.msra.mxu0 %v583
    %681 = vmatprep.subr.bf16.mxu0 %v586
    %682 = vmatpush1.bf16.msra.mxu0 %v585
    %683 = vmatprep.subr.bf16.mxu0 %v588
    %684 = vmatpush1.bf16.msra.mxu0 %v587
    %685 = vmatprep.subr.bf16.mxu0 %v590
    %686 = vmatpush1.bf16.msra.mxu0 %v589
    %687 = vmatprep.subr.bf16.mxu0 %v592
    %688 = vmatpush1.bf16.msra.mxu0 %v591
    %689 = vmatprep.subr.bf16.mxu0 %v594
    %690 = vmatpush1.bf16.msra.mxu0 %v593
    %691 = vmatprep.subr.bf16.mxu0 %v596
    %692 = vmatpush1.bf16.msra.mxu0 %v595
    %693 = vmatprep.subr.bf16.mxu0 %v598
    %694 = vmatpush1.bf16.msra.mxu0 %v597
    %695 = vmatprep.mubr.bf16.mxu0 %v328
    %696 = vmatmul.mubr.bf16.gmra.mrb[0].mxu0 %v327
    %v697 = vpop.f32.mrb[0].mxu0
    %v698 = vadd.f32 %v160, %v697
    %v699 = vpop.f32.mrb[0].mxu0
    %v700 = vadd.f32 %v164, %v699
    %v701 = vpop.f32.mrb[0].mxu0
    %v702 = vadd.f32 %v160, %v701
    %v703 = vpop.f32.mrb[0].mxu0
    %v704 = vadd.f32 %v164, %v703
    %705 = vmatprep.mubr.bf16.mxu0 %v331
    %706 = vmatmul.mubr.bf16.gmra.mrb[0].mxu0 %v330
    %v707 = vpop.f32.mrb[0].mxu0
    %v708 = vadd.f32 %v160, %v707
    %v709 = vpop.f32.mrb[0].mxu0
    %v710 = vadd.f32 %v164, %v709
    %v711 = vpop.f32.mrb[0].mxu0
    %v712 = vadd.f32 %v160, %v711
    %v713 = vpop.f32.mrb[0].mxu0
    %v714 = vadd.f32 %v164, %v713
    %715 = vmatprep.mubr.bf16.mxu0 %v334
    %716 = vmatmul.mubr.bf16.gmra.mrb[0].mxu0 %v333
    %v717 = vpop.f32.mrb[0].mxu0
    %v718 = vadd.f32 %v160, %v717
    %v719 = vpop.f32.mrb[0].mxu0
    %v720 = vadd.f32 %v164, %v719
    %v721 = vpop.f32.mrb[0].mxu0
    %v722 = vadd.f32 %v160, %v721
    %v723 = vpop.f32.mrb[0].mxu0
    %v724 = vadd.f32 %v164, %v723
    %725 = vmatprep.mubr.bf16.mxu0 %v337
    %726 = vmatmul.mubr.bf16.gmra.mrb[0].mxu0 %v336
    %v727 = vpop.f32.mrb[0].mxu0
    %v728 = vadd.f32 %v160, %v727
    %v729 = vpop.f32.mrb[0].mxu0
    %v730 = vadd.f32 %v164, %v729
    %v731 = vpop.f32.mrb[0].mxu0
    %v732 = vadd.f32 %v160, %v731
    %v733 = vpop.f32.mrb[0].mxu0
    %v734 = vadd.f32 %v164, %v733
    %735 = vmatprep.mubr.bf16.mxu0 %v340
    %736 = vmatmul.mubr.bf16.gmra.mrb[0].mxu0 %v339
    %v737 = vpop.f32.mrb[0].mxu0
    %v738 = vadd.f32 %v160, %v737
    %v739 = vpop.f32.mrb[0].mxu0
    %v740 = vadd.f32 %v164, %v739
    %v741 = vpop.f32.mrb[0].mxu0
    %v742 = vadd.f32 %v160, %v741
    %v743 = vpop.f32.mrb[0].mxu0
    %v744 = vadd.f32 %v164, %v743
    %745 = vmatprep.mubr.bf16.mxu0 %v343
    %746 = vmatmul.mubr.bf16.gmra.mrb[0].mxu0 %v342
    %v747 = vpop.f32.mrb[0].mxu0
    %v748 = vadd.f32 %v160, %v747
    %v749 = vpop.f32.mrb[0].mxu0
    %v750 = vadd.f32 %v164, %v749
    %v751 = vpop.f32.mrb[0].mxu0
    %v752 = vadd.f32 %v160, %v751
    %v753 = vpop.f32.mrb[0].mxu0
    %v754 = vadd.f32 %v164, %v753
    %755 = vmatprep.mubr.bf16.mxu0 %v346
    %756 = vmatmul.mubr.bf16.gmra.mrb[0].mxu0 %v345
    %v757 = vpop.f32.mrb[0].mxu0
    %v758 = vadd.f32 %v160, %v757
    %v759 = vpop.f32.mrb[0].mxu0
    %v760 = vadd.f32 %v164, %v759
    %v761 = vpop.f32.mrb[0].mxu0
    %v762 = vadd.f32 %v160, %v761
    %v763 = vpop.f32.mrb[0].mxu0
    %v764 = vadd.f32 %v164, %v763
    %765 = vmatprep.mubr.bf16.mxu0 %v349
    %766 = vmatmul.mubr.bf16.gmra.mrb[0].mxu0 %v348
    %v767 = vpop.f32.mrb[0].mxu0
    %v768 = vadd.f32 %v160, %v767
    %v769 = vpop.f32.mrb[0].mxu0
    %v770 = vadd.f32 %v164, %v769
    %v771 = vpop.f32.mrb[0].mxu0
    %v772 = vadd.f32 %v160, %v771
    %v773 = vpop.f32.mrb[0].mxu0
    %v774 = vadd.f32 %v164, %v773
    %775 = vmatprep.mubr.bf16.mxu0 %v352
    %776 = vmatmul.mubr.bf16.gmra.mrb[0].mxu0 %v351
    %v777 = vpop.f32.mrb[0].mxu0
    %v778 = vadd.f32 %v160, %v777
    %v779 = vpop.f32.mrb[0].mxu0
    %v780 = vadd.f32 %v164, %v779
    %v781 = vpop.f32.mrb[0].mxu0
    %v782 = vadd.f32 %v160, %v781
    %v783 = vpop.f32.mrb[0].mxu0
    %v784 = vadd.f32 %v164, %v783
    %785 = vmatprep.mubr.bf16.mxu0 %v355
    %786 = vmatmul.mubr.bf16.gmra.mrb[0].mxu0 %v354
    %v787 = vpop.f32.mrb[0].mxu0
    %v788 = vadd.f32 %v160, %v787
    %v789 = vpop.f32.mrb[0].mxu0
    %v790 = vadd.f32 %v164, %v789
    %v791 = vpop.f32.mrb[0].mxu0
    %v792 = vadd.f32 %v160, %v791
    %v793 = vpop.f32.mrb[0].mxu0
    %v794 = vadd.f32 %v164, %v793
    %795 = vmatprep.mubr.bf16.mxu0 %v358
    %796 = vmatmul.mubr.bf16.gmra.mrb[0].mxu0 %v357
    %v797 = vpop.f32.mrb[0].mxu0
    %v798 = vadd.f32 %v160, %v797
    %v799 = vpop.f32.mrb[0].mxu0
    %v800 = vadd.f32 %v164, %v799
    %v801 = vpop.f32.mrb[0].mxu0
    %v802 = vadd.f32 %v160, %v801
    %v803 = vpop.f32.mrb[0].mxu0
    %v804 = vadd.f32 %v164, %v803
    %805 = vmatprep.mubr.bf16.mxu0 %v361
    %806 = vmatmul.mubr.bf16.gmra.mrb[0].mxu0 %v360
    %v807 = vpop.f32.mrb[0].mxu0
    %v808 = vadd.f32 %v160, %v807
    %v809 = vpop.f32.mrb[0].mxu0
    %v810 = vadd.f32 %v164, %v809
    %v811 = vpop.f32.mrb[0].mxu0
    %v812 = vadd.f32 %v160, %v811
    %v813 = vpop.f32.mrb[0].mxu0
    %v814 = vadd.f32 %v164, %v813
    %815 = vmatprep.mubr.bf16.mxu0 %v364
    %816 = vmatmul.mubr.bf16.gmra.mrb[0].mxu0 %v363
    %v817 = vpop.f32.mrb[0].mxu0
    %v818 = vadd.f32 %v160, %v817
    %v819 = vpop.f32.mrb[0].mxu0
    %v820 = vadd.f32 %v164, %v819
    %v821 = vpop.f32.mrb[0].mxu0
    %v822 = vadd.f32 %v160, %v821
    %v823 = vpop.f32.mrb[0].mxu0
    %v824 = vadd.f32 %v164, %v823
    %825 = vmatprep.mubr.bf16.mxu0 %v367
    %826 = vmatmul.mubr.bf16.gmra.mrb[0].mxu0 %v366
    %v827 = vpop.f32.mrb[0].mxu0
    %v828 = vadd.f32 %v160, %v827
    %v829 = vpop.f32.mrb[0].mxu0
    %v830 = vadd.f32 %v164, %v829
    %v831 = vpop.f32.mrb[0].mxu0
    %v832 = vadd.f32 %v160, %v831
    %v833 = vpop.f32.mrb[0].mxu0
    %v834 = vadd.f32 %v164, %v833
    %835 = vmatprep.mubr.bf16.mxu0 %v370
    %836 = vmatmul.mubr.bf16.gmra.mrb[0].mxu0 %v369
    %v837 = vpop.f32.mrb[0].mxu0
    %v838 = vadd.f32 %v160, %v837
    %v839 = vpop.f32.mrb[0].mxu0
    %v840 = vadd.f32 %v164, %v839
    %v841 = vpop.f32.mrb[0].mxu0
    %v842 = vadd.f32 %v160, %v841
    %v843 = vpop.f32.mrb[0].mxu0
    %v844 = vadd.f32 %v164, %v843
    %845 = vmatprep.mubr.bf16.mxu0 %v373
    %846 = vmatmul.mubr.bf16.gmra.mrb[0].mxu0 %v372
    %v847 = vpop.f32.mrb[0].mxu0
    %v848 = vadd.f32 %v160, %v847
    %v849 = vpop.f32.mrb[0].mxu0
    %v850 = vadd.f32 %v164, %v849
    %v851 = vpop.f32.mrb[0].mxu0
    %v852 = vadd.f32 %v160, %v851
    %v853 = vpop.f32.mrb[0].mxu0
    %v854 = vadd.f32 %v164, %v853
    %855 = vdwg.mxu0
    %856 = vmatprep.subr.bf16.mxu0 %v600
    %857 = vmatpush1.bf16.msra.mxu0 %v599
    %858 = vmatprep.subr.bf16.mxu0 %v602
    %859 = vmatpush1.bf16.msra.mxu0 %v601
    %860 = vmatprep.subr.bf16.mxu0 %v604
    %861 = vmatpush1.bf16.msra.mxu0 %v603
    %862 = vmatprep.subr.bf16.mxu0 %v606
    %863 = vmatpush1.bf16.msra.mxu0 %v605
    %864 = vmatprep.subr.bf16.mxu0 %v608
    %865 = vmatpush1.bf16.msra.mxu0 %v607
    %866 = vmatprep.subr.bf16.mxu0 %v610
    %867 = vmatpush1.bf16.msra.mxu0 %v609
    %868 = vmatprep.subr.bf16.mxu0 %v612
    %869 = vmatpush1.bf16.msra.mxu0 %v611
    %870 = vmatprep.subr.bf16.mxu0 %v614
    %871 = vmatpush1.bf16.msra.mxu0 %v613
    %872 = vmatprep.subr.bf16.mxu0 0
    %873 = vmatpush1.bf16.msra.mxu0 0
    %874 = vmatprep.subr.bf16.mxu0 0
    %875 = vmatpush1.bf16.msra.mxu0 0
    %876 = vmatprep.subr.bf16.mxu0 0
    %877 = vmatpush1.bf16.msra.mxu0 0
    %878 = vmatprep.subr.bf16.mxu0 0
    %879 = vmatpush1.bf16.msra.mxu0 0
    %880 = vmatprep.subr.bf16.mxu0 0
    %881 = vmatpush1.bf16.msra.mxu0 0
    %882 = vmatprep.subr.bf16.mxu0 0
    %883 = vmatpush1.bf16.msra.mxu0 0
    %884 = vmatprep.subr.bf16.mxu0 0
    %885 = vmatpush1.bf16.msra.mxu0 0
    %886 = vmatprep.subr.bf16.mxu0 0
    %887 = vmatpush1.bf16.msra.mxu0 0
    %888 = vmatprep.mubr.bf16.mxu0 0
    %889 = vmatmul.mubr.bf16.gmra.mrb[0].mxu0 %v329
    %v890 = vpop.f32.mrb[0].mxu0
    %v891 = vadd.f32 %v698, %v890
    %v892 = vpop.f32.mrb[0].mxu0
    %v893 = vadd.f32 %v700, %v892
    %v894 = vpop.f32.mrb[0].mxu0
    %v895 = vadd.f32 %v702, %v894
    %v896 = vpop.f32.mrb[0].mxu0
    %v897 = vadd.f32 %v704, %v896
    %898 = vmatprep.mubr.bf16.mxu0 0
    %899 = vmatmul.mubr.bf16.gmra.mrb[0].mxu0 %v332
    %v900 = vpop.f32.mrb[0].mxu0
    %v901 = vadd.f32 %v708, %v900
    %v902 = vpop.f32.mrb[0].mxu0
    %v903 = vadd.f32 %v710, %v902
    %v904 = vpop.f32.mrb[0].mxu0
    %v905 = vadd.f32 %v712, %v904
    %v906 = vpop.f32.mrb[0].mxu0
    %v907 = vadd.f32 %v714, %v906
    %908 = vmatprep.mubr.bf16.mxu0 0
    %909 = vmatmul.mubr.bf16.gmra.mrb[0].mxu0 %v335
    %v910 = vpop.f32.mrb[0].mxu0
    %v911 = vadd.f32 %v718, %v910
    %v912 = vpop.f32.mrb[0].mxu0
    %v913 = vadd.f32 %v720, %v912
    %v914 = vpop.f32.mrb[0].mxu0
    %v915 = vadd.f32 %v722, %v914
    %v916 = vpop.f32.mrb[0].mxu0
    %v917 = vadd.f32 %v724, %v916
    %918 = vmatprep.mubr.bf16.mxu0 0
    %919 = vmatmul.mubr.bf16.gmra.mrb[0].mxu0 %v338
    %v920 = vpop.f32.mrb[0].mxu0
    %v921 = vadd.f32 %v728, %v920
    %v922 = vpop.f32.mrb[0].mxu0
    %v923 = vadd.f32 %v730, %v922
    %v924 = vpop.f32.mrb[0].mxu0
    %v925 = vadd.f32 %v732, %v924
    %v926 = vpop.f32.mrb[0].mxu0
    %v927 = vadd.f32 %v734, %v926
    %928 = vmatprep.mubr.bf16.mxu0 0
    %929 = vmatmul.mubr.bf16.gmra.mrb[0].mxu0 %v341
    %v930 = vpop.f32.mrb[0].mxu0
    %v931 = vadd.f32 %v738, %v930
    %v932 = vpop.f32.mrb[0].mxu0
    %v933 = vadd.f32 %v740, %v932
    %v934 = vpop.f32.mrb[0].mxu0
    %v935 = vadd.f32 %v742, %v934
    %v936 = vpop.f32.mrb[0].mxu0
    %v937 = vadd.f32 %v744, %v936
    %938 = vmatprep.mubr.bf16.mxu0 0
    %939 = vmatmul.mubr.bf16.gmra.mrb[0].mxu0 %v344
    %v940 = vpop.f32.mrb[0].mxu0
    %v941 = vadd.f32 %v748, %v940
    %v942 = vpop.f32.mrb[0].mxu0
    %v943 = vadd.f32 %v750, %v942
    %v944 = vpop.f32.mrb[0].mxu0
    %v945 = vadd.f32 %v752, %v944
    %v946 = vpop.f32.mrb[0].mxu0
    %v947 = vadd.f32 %v754, %v946
    %948 = vmatprep.mubr.bf16.mxu0 0
    %949 = vmatmul.mubr.bf16.gmra.mrb[0].mxu0 %v347
    %v950 = vpop.f32.mrb[0].mxu0
    %v951 = vadd.f32 %v758, %v950
    %v952 = vpop.f32.mrb[0].mxu0
    %v953 = vadd.f32 %v760, %v952
    %v954 = vpop.f32.mrb[0].mxu0
    %v955 = vadd.f32 %v762, %v954
    %v956 = vpop.f32.mrb[0].mxu0
    %v957 = vadd.f32 %v764, %v956
    %958 = vmatprep.mubr.bf16.mxu0 0
    %959 = vmatmul.mubr.bf16.gmra.mrb[0].mxu0 %v350
    %v960 = vpop.f32.mrb[0].mxu0
    %v961 = vadd.f32 %v768, %v960
    %v962 = vpop.f32.mrb[0].mxu0
    %v963 = vadd.f32 %v770, %v962
    %v964 = vpop.f32.mrb[0].mxu0
    %v965 = vadd.f32 %v772, %v964
    %v966 = vpop.f32.mrb[0].mxu0
    %v967 = vadd.f32 %v774, %v966
    %968 = vmatprep.mubr.bf16.mxu0 0
    %969 = vmatmul.mubr.bf16.gmra.mrb[0].mxu0 %v353
    %v970 = vpop.f32.mrb[0].mxu0
    %v971 = vadd.f32 %v778, %v970
    %v972 = vpop.f32.mrb[0].mxu0
    %v973 = vadd.f32 %v780, %v972
    %v974 = vpop.f32.mrb[0].mxu0
    %v975 = vadd.f32 %v782, %v974
    %v976 = vpop.f32.mrb[0].mxu0
    %v977 = vadd.f32 %v784, %v976
    %978 = vmatprep.mubr.bf16.mxu0 0
    %979 = vmatmul.mubr.bf16.gmra.mrb[0].mxu0 %v356
    %v980 = vpop.f32.mrb[0].mxu0
    %v981 = vadd.f32 %v788, %v980
    %v982 = vpop.f32.mrb[0].mxu0
    %v983 = vadd.f32 %v790, %v982
    %v984 = vpop.f32.mrb[0].mxu0
    %v985 = vadd.f32 %v792, %v984
    %v986 = vpop.f32.mrb[0].mxu0
    %v987 = vadd.f32 %v794, %v986
    %988 = vmatprep.mubr.bf16.mxu0 0
    %989 = vmatmul.mubr.bf16.gmra.mrb[0].mxu0 %v359
    %v990 = vpop.f32.mrb[0].mxu0
    %v991 = vadd.f32 %v798, %v990
    %v992 = vpop.f32.mrb[0].mxu0
    %v993 = vadd.f32 %v800, %v992
    %v994 = vpop.f32.mrb[0].mxu0
    %v995 = vadd.f32 %v802, %v994
    %v996 = vpop.f32.mrb[0].mxu0
    %v997 = vadd.f32 %v804, %v996
    %998 = vmatprep.mubr.bf16.mxu0 0
    %999 = vmatmul.mubr.bf16.gmra.mrb[0].mxu0 %v362
    %v1000 = vpop.f32.mrb[0].mxu0
    %v1001 = vadd.f32 %v808, %v1000
    %v1002 = vpop.f32.mrb[0].mxu0
    %v1003 = vadd.f32 %v810, %v1002
    %v1004 = vpop.f32.mrb[0].mxu0
    %v1005 = vadd.f32 %v812, %v1004
    %v1006 = vpop.f32.mrb[0].mxu0
    %v1007 = vadd.f32 %v814, %v1006
    %1008 = vmatprep.mubr.bf16.mxu0 0
    %1009 = vmatmul.mubr.bf16.gmra.mrb[0].mxu0 %v365
    %v1010 = vpop.f32.mrb[0].mxu0
    %v1011 = vadd.f32 %v818, %v1010
    %v1012 = vpop.f32.mrb[0].mxu0
    %v1013 = vadd.f32 %v820, %v1012
    %v1014 = vpop.f32.mrb[0].mxu0
    %v1015 = vadd.f32 %v822, %v1014
    %v1016 = vpop.f32.mrb[0].mxu0
    %v1017 = vadd.f32 %v824, %v1016
    %1018 = vmatprep.mubr.bf16.mxu0 0
    %1019 = vmatmul.mubr.bf16.gmra.mrb[0].mxu0 %v368
    %v1020 = vpop.f32.mrb[0].mxu0
    %v1021 = vadd.f32 %v828, %v1020
    %v1022 = vpop.f32.mrb[0].mxu0
    %v1023 = vadd.f32 %v830, %v1022
    %v1024 = vpop.f32.mrb[0].mxu0
    %v1025 = vadd.f32 %v832, %v1024
    %v1026 = vpop.f32.mrb[0].mxu0
    %v1027 = vadd.f32 %v834, %v1026
    %1028 = vmatprep.mubr.bf16.mxu0 0
    %1029 = vmatmul.mubr.bf16.gmra.mrb[0].mxu0 %v371
    %v1030 = vpop.f32.mrb[0].mxu0
    %v1031 = vadd.f32 %v838, %v1030
    %v1032 = vpop.f32.mrb[0].mxu0
    %v1033 = vadd.f32 %v840, %v1032
    %v1034 = vpop.f32.mrb[0].mxu0
    %v1035 = vadd.f32 %v842, %v1034
    %v1036 = vpop.f32.mrb[0].mxu0
    %v1037 = vadd.f32 %v844, %v1036
    %1038 = vmatprep.mubr.bf16.mxu0 0
    %1039 = vmatmul.mubr.bf16.gmra.mrb[0].mxu0 %v374
    %v1040 = vpop.f32.mrb[0].mxu0
    %v1041 = vadd.f32 %v848, %v1040
    %v1042 = vpop.f32.mrb[0].mxu0
    %v1043 = vadd.f32 %v850, %v1042
    %v1044 = vpop.f32.mrb[0].mxu0
    %v1045 = vadd.f32 %v852, %v1044
    %v1046 = vpop.f32.mrb[0].mxu0
    %v1047 = vadd.f32 %v854, %v1046
    %1048 = vdwg.mxu0
    %vm1049 = vcmp.gt.f32.partialorder %v891, 0.0
    %vm1050 = vcmp.gt.f32.partialorder %v893, 0.0
    %vm1051 = vcmp.gt.f32.partialorder %v895, 0.0
    %vm1052 = vcmp.gt.f32.partialorder %v897, 0.0
    %vm1053 = vcmp.gt.f32.partialorder %v901, 0.0
    %vm1054 = vcmp.gt.f32.partialorder %v903, 0.0
    %vm1055 = vcmp.gt.f32.partialorder %v905, 0.0
    %vm1056 = vcmp.gt.f32.partialorder %v907, 0.0
    %vm1057 = vcmp.gt.f32.partialorder %v911, 0.0
    %vm1058 = vcmp.gt.f32.partialorder %v913, 0.0
    %vm1059 = vcmp.gt.f32.partialorder %v915, 0.0
    %vm1060 = vcmp.gt.f32.partialorder %v917, 0.0
    %vm1061 = vcmp.gt.f32.partialorder %v921, 0.0
    %vm1062 = vcmp.gt.f32.partialorder %v923, 0.0
    %vm1063 = vcmp.gt.f32.partialorder %v925, 0.0
    %vm1064 = vcmp.gt.f32.partialorder %v927, 0.0
    %vm1065 = vcmp.gt.f32.partialorder %v931, 0.0
    %vm1066 = vcmp.gt.f32.partialorder %v933, 0.0
    %vm1067 = vcmp.gt.f32.partialorder %v935, 0.0
    %vm1068 = vcmp.gt.f32.partialorder %v937, 0.0
    %vm1069 = vcmp.gt.f32.partialorder %v941, 0.0
    %vm1070 = vcmp.gt.f32.partialorder %v943, 0.0
    %vm1071 = vcmp.gt.f32.partialorder %v945, 0.0
    %vm1072 = vcmp.gt.f32.partialorder %v947, 0.0
    %vm1073 = vcmp.gt.f32.partialorder %v951, 0.0
    %vm1074 = vcmp.gt.f32.partialorder %v953, 0.0
    %vm1075 = vcmp.gt.f32.partialorder %v955, 0.0
    %vm1076 = vcmp.gt.f32.partialorder %v957, 0.0
    %vm1077 = vcmp.gt.f32.partialorder %v961, 0.0
    %vm1078 = vcmp.gt.f32.partialorder %v963, 0.0
    %vm1079 = vcmp.gt.f32.partialorder %v965, 0.0
    %vm1080 = vcmp.gt.f32.partialorder %v967, 0.0
    %vm1081 = vcmp.gt.f32.partialorder %v971, 0.0
    %vm1082 = vcmp.gt.f32.partialorder %v973, 0.0
    %vm1083 = vcmp.gt.f32.partialorder %v975, 0.0
    %vm1084 = vcmp.gt.f32.partialorder %v977, 0.0
    %vm1085 = vcmp.gt.f32.partialorder %v981, 0.0
    %vm1086 = vcmp.gt.f32.partialorder %v983, 0.0
    %vm1087 = vcmp.gt.f32.partialorder %v985, 0.0
    %vm1088 = vcmp.gt.f32.partialorder %v987, 0.0
    %vm1089 = vcmp.gt.f32.partialorder %v991, 0.0
    %vm1090 = vcmp.gt.f32.partialorder %v993, 0.0
    %vm1091 = vcmp.gt.f32.partialorder %v995, 0.0
    %vm1092 = vcmp.gt.f32.partialorder %v997, 0.0
    %vm1093 = vcmp.gt.f32.partialorder %v1001, 0.0
    %vm1094 = vcmp.gt.f32.partialorder %v1003, 0.0
    %vm1095 = vcmp.gt.f32.partialorder %v1005, 0.0
    %vm1096 = vcmp.gt.f32.partialorder %v1007, 0.0
    %vm1097 = vcmp.gt.f32.partialorder %v1011, 0.0
    %vm1098 = vcmp.gt.f32.partialorder %v1013, 0.0
    %vm1099 = vcmp.gt.f32.partialorder %v1015, 0.0
    %vm1100 = vcmp.gt.f32.partialorder %v1017, 0.0
    %vm1101 = vcmp.gt.f32.partialorder %v1021, 0.0
    %vm1102 = vcmp.gt.f32.partialorder %v1023, 0.0
    %vm1103 = vcmp.gt.f32.partialorder %v1025, 0.0
    %vm1104 = vcmp.gt.f32.partialorder %v1027, 0.0
    %vm1105 = vcmp.gt.f32.partialorder %v1031, 0.0
    %vm1106 = vcmp.gt.f32.partialorder %v1033, 0.0
    %vm1107 = vcmp.gt.f32.partialorder %v1035, 0.0
    %vm1108 = vcmp.gt.f32.partialorder %v1037, 0.0
    %vm1109 = vcmp.gt.f32.partialorder %v1041, 0.0
    %vm1110 = vcmp.gt.f32.partialorder %v1043, 0.0
    %vm1111 = vcmp.gt.f32.partialorder %v1045, 0.0
    %vm1112 = vcmp.gt.f32.partialorder %v1047, 0.0
    %v1113 = vmul.f32 %v891, 1.442695
    %v1114 = vpow.pop %v1113
    %v1115 = vmul.f32 %v893, 1.442695
    %v1116 = vpow.pop %v1115
    %v1117 = vmul.f32 %v895, 1.442695
    %v1118 = vpow.pop %v1117
    %v1119 = vmul.f32 %v897, 1.442695
    %v1120 = vpow.pop %v1119
    %v1121 = vmul.f32 %v901, 1.442695
    %v1122 = vpow.pop %v1121
    %v1123 = vmul.f32 %v903, 1.442695
    %v1124 = vpow.pop %v1123
    %v1125 = vmul.f32 %v905, 1.442695
    %v1126 = vpow.pop %v1125
    %v1127 = vmul.f32 %v907, 1.442695
    %v1128 = vpow.pop %v1127
    %v1129 = vmul.f32 %v911, 1.442695
    %v1130 = vpow.pop %v1129
    %v1131 = vmul.f32 %v913, 1.442695
    %v1132 = vpow.pop %v1131
    %v1133 = vmul.f32 %v915, 1.442695
    %v1134 = vpow.pop %v1133
    %v1135 = vmul.f32 %v917, 1.442695
    %v1136 = vpow.pop %v1135
    %v1137 = vmul.f32 %v921, 1.442695
    %v1138 = vpow.pop %v1137
    %v1139 = vmul.f32 %v923, 1.442695
    %v1140 = vpow.pop %v1139
    %v1141 = vmul.f32 %v925, 1.442695
    %v1142 = vpow.pop %v1141
    %v1143 = vmul.f32 %v927, 1.442695
    %v1144 = vpow.pop %v1143
    %v1145 = vmul.f32 %v931, 1.442695
    %v1146 = vpow.pop %v1145
    %v1147 = vmul.f32 %v933, 1.442695
    %v1148 = vpow.pop %v1147
    %v1149 = vmul.f32 %v935, 1.442695
    %v1150 = vpow.pop %v1149
    %v1151 = vmul.f32 %v937, 1.442695
    %v1152 = vpow.pop %v1151
    %v1153 = vmul.f32 %v941, 1.442695
    %v1154 = vpow.pop %v1153
    %v1155 = vmul.f32 %v943, 1.442695
    %v1156 = vpow.pop %v1155
    %v1157 = vmul.f32 %v945, 1.442695
    %v1158 = vpow.pop %v1157
    %v1159 = vmul.f32 %v947, 1.442695
    %v1160 = vpow.pop %v1159
    %v1161 = vmul.f32 %v951, 1.442695
    %v1162 = vpow.pop %v1161
    %v1163 = vmul.f32 %v953, 1.442695
    %v1164 = vpow.pop %v1163
    %v1165 = vmul.f32 %v955, 1.442695
    %v1166 = vpow.pop %v1165
    %v1167 = vmul.f32 %v957, 1.442695
    %v1168 = vpow.pop %v1167
    %v1169 = vmul.f32 %v961, 1.442695
    %v1170 = vpow.pop %v1169
    %v1171 = vmul.f32 %v963, 1.442695
    %v1172 = vpow.pop %v1171
    %v1173 = vmul.f32 %v965, 1.442695
    %v1174 = vpow.pop %v1173
    %v1175 = vmul.f32 %v967, 1.442695
    %v1176 = vpow.pop %v1175
    %v1177 = vmul.f32 %v971, 1.442695
    %v1178 = vpow.pop %v1177
    %v1179 = vmul.f32 %v973, 1.442695
    %v1180 = vpow.pop %v1179
    %v1181 = vmul.f32 %v975, 1.442695
    %v1182 = vpow.pop %v1181
    %v1183 = vmul.f32 %v977, 1.442695
    %v1184 = vpow.pop %v1183
    %v1185 = vmul.f32 %v981, 1.442695
    %v1186 = vpow.pop %v1185
    %v1187 = vmul.f32 %v983, 1.442695
    %v1188 = vpow.pop %v1187
    %v1189 = vmul.f32 %v985, 1.442695
    %v1190 = vpow.pop %v1189
    %v1191 = vmul.f32 %v987, 1.442695
    %v1192 = vpow.pop %v1191
    %v1193 = vmul.f32 %v991, 1.442695
    %v1194 = vpow.pop %v1193
    %v1195 = vmul.f32 %v993, 1.442695
    %v1196 = vpow.pop %v1195
    %v1197 = vmul.f32 %v995, 1.442695
    %v1198 = vpow.pop %v1197
    %v1199 = vmul.f32 %v997, 1.442695
    %v1200 = vpow.pop %v1199
    %v1201 = vmul.f32 %v1001, 1.442695
    %v1202 = vpow.pop %v1201
    %v1203 = vmul.f32 %v1003, 1.442695
    %v1204 = vpow.pop %v1203
    %v1205 = vmul.f32 %v1005, 1.442695
    %v1206 = vpow.pop %v1205
    %v1207 = vmul.f32 %v1007, 1.442695
    %v1208 = vpow.pop %v1207
    %v1209 = vmul.f32 %v1011, 1.442695
    %v1210 = vpow.pop %v1209
    %v1211 = vmul.f32 %v1013, 1.442695
    %v1212 = vpow.pop %v1211
    %v1213 = vmul.f32 %v1015, 1.442695
    %v1214 = vpow.pop %v1213
    %v1215 = vmul.f32 %v1017, 1.442695
    %v1216 = vpow.pop %v1215
    %v1217 = vmul.f32 %v1021, 1.442695
    %v1218 = vpow.pop %v1217
    %v1219 = vmul.f32 %v1023, 1.442695
    %v1220 = vpow.pop %v1219
    %v1221 = vmul.f32 %v1025, 1.442695
    %v1222 = vpow.pop %v1221
    %v1223 = vmul.f32 %v1027, 1.442695
    %v1224 = vpow.pop %v1223
    %v1225 = vmul.f32 %v1031, 1.442695
    %v1226 = vpow.pop %v1225
    %v1227 = vmul.f32 %v1033, 1.442695
    %v1228 = vpow.pop %v1227
    %v1229 = vmul.f32 %v1035, 1.442695
    %v1230 = vpow.pop %v1229
    %v1231 = vmul.f32 %v1037, 1.442695
    %v1232 = vpow.pop %v1231
    %v1233 = vmul.f32 %v1041, 1.442695
    %v1234 = vpow.pop %v1233
    %v1235 = vmul.f32 %v1043, 1.442695
    %v1236 = vpow.pop %v1235
    %v1237 = vmul.f32 %v1045, 1.442695
    %v1238 = vpow.pop %v1237
    %v1239 = vmul.f32 %v1047, 1.442695
    %v1240 = vpow.pop %v1239
    %v1241 = vsub.f32 %v1114, 1.0
    %v1242 = vsub.f32 %v1116, 1.0
    %v1243 = vsub.f32 %v1118, 1.0
    %v1244 = vsub.f32 %v1120, 1.0
    %v1245 = vsub.f32 %v1122, 1.0
    %v1246 = vsub.f32 %v1124, 1.0
    %v1247 = vsub.f32 %v1126, 1.0
    %v1248 = vsub.f32 %v1128, 1.0
    %v1249 = vsub.f32 %v1130, 1.0
    %v1250 = vsub.f32 %v1132, 1.0
    %v1251 = vsub.f32 %v1134, 1.0
    %v1252 = vsub.f32 %v1136, 1.0
    %v1253 = vsub.f32 %v1138, 1.0
    %v1254 = vsub.f32 %v1140, 1.0
    %v1255 = vsub.f32 %v1142, 1.0
    %v1256 = vsub.f32 %v1144, 1.0
    %v1257 = vsub.f32 %v1146, 1.0
    %v1258 = vsub.f32 %v1148, 1.0
    %v1259 = vsub.f32 %v1150, 1.0
    %v1260 = vsub.f32 %v1152, 1.0
    %v1261 = vsub.f32 %v1154, 1.0
    %v1262 = vsub.f32 %v1156, 1.0
    %v1263 = vsub.f32 %v1158, 1.0
    %v1264 = vsub.f32 %v1160, 1.0
    %v1265 = vsub.f32 %v1162, 1.0
    %v1266 = vsub.f32 %v1164, 1.0
    %v1267 = vsub.f32 %v1166, 1.0
    %v1268 = vsub.f32 %v1168, 1.0
    %v1269 = vsub.f32 %v1170, 1.0
    %v1270 = vsub.f32 %v1172, 1.0
    %v1271 = vsub.f32 %v1174, 1.0
    %v1272 = vsub.f32 %v1176, 1.0
    %v1273 = vsub.f32 %v1178, 1.0
    %v1274 = vsub.f32 %v1180, 1.0
    %v1275 = vsub.f32 %v1182, 1.0
    %v1276 = vsub.f32 %v1184, 1.0
    %v1277 = vsub.f32 %v1186, 1.0
    %v1278 = vsub.f32 %v1188, 1.0
    %v1279 = vsub.f32 %v1190, 1.0
    %v1280 = vsub.f32 %v1192, 1.0
    %v1281 = vsub.f32 %v1194, 1.0
    %v1282 = vsub.f32 %v1196, 1.0
    %v1283 = vsub.f32 %v1198, 1.0
    %v1284 = vsub.f32 %v1200, 1.0
    %v1285 = vsub.f32 %v1202, 1.0
    %v1286 = vsub.f32 %v1204, 1.0
    %v1287 = vsub.f32 %v1206, 1.0
    %v1288 = vsub.f32 %v1208, 1.0
    %v1289 = vsub.f32 %v1210, 1.0
    %v1290 = vsub.f32 %v1212, 1.0
    %v1291 = vsub.f32 %v1214, 1.0
    %v1292 = vsub.f32 %v1216, 1.0
    %v1293 = vsub.f32 %v1218, 1.0
    %v1294 = vsub.f32 %v1220, 1.0
    %v1295 = vsub.f32 %v1222, 1.0
    %v1296 = vsub.f32 %v1224, 1.0
    %v1297 = vsub.f32 %v1226, 1.0
    %v1298 = vsub.f32 %v1228, 1.0
    %v1299 = vsub.f32 %v1230, 1.0
    %v1300 = vsub.f32 %v1232, 1.0
    %v1301 = vsub.f32 %v1234, 1.0
    %v1302 = vsub.f32 %v1236, 1.0
    %v1303 = vsub.f32 %v1238, 1.0
    %v1304 = vsub.f32 %v1240, 1.0
    %v1305 = vsel %vm1049, %v891, %v1241
    %v1306 = vsel %vm1050, %v893, %v1242
    %v1307 = vsel %vm1051, %v895, %v1243
    %v1308 = vsel %vm1052, %v897, %v1244
    %v1309 = vsel %vm1053, %v901, %v1245
    %v1310 = vsel %vm1054, %v903, %v1246
    %v1311 = vsel %vm1055, %v905, %v1247
    %v1312 = vsel %vm1056, %v907, %v1248
    %v1313 = vsel %vm1057, %v911, %v1249
    %v1314 = vsel %vm1058, %v913, %v1250
    %v1315 = vsel %vm1059, %v915, %v1251
    %v1316 = vsel %vm1060, %v917, %v1252
    %v1317 = vsel %vm1061, %v921, %v1253
    %v1318 = vsel %vm1062, %v923, %v1254
    %v1319 = vsel %vm1063, %v925, %v1255
    %v1320 = vsel %vm1064, %v927, %v1256
    %v1321 = vsel %vm1065, %v931, %v1257
    %v1322 = vsel %vm1066, %v933, %v1258
    %v1323 = vsel %vm1067, %v935, %v1259
    %v1324 = vsel %vm1068, %v937, %v1260
    %v1325 = vsel %vm1069, %v941, %v1261
    %v1326 = vsel %vm1070, %v943, %v1262
    %v1327 = vsel %vm1071, %v945, %v1263
    %v1328 = vsel %vm1072, %v947, %v1264
    %v1329 = vsel %vm1073, %v951, %v1265
    %v1330 = vsel %vm1074, %v953, %v1266
    %v1331 = vsel %vm1075, %v955, %v1267
    %v1332 = vsel %vm1076, %v957, %v1268
    %v1333 = vsel %vm1077, %v961, %v1269
    %v1334 = vsel %vm1078, %v963, %v1270
    %v1335 = vsel %vm1079, %v965, %v1271
    %v1336 = vsel %vm1080, %v967, %v1272
    %v1337 = vsel %vm1081, %v971, %v1273
    %v1338 = vsel %vm1082, %v973, %v1274
    %v1339 = vsel %vm1083, %v975, %v1275
    %v1340 = vsel %vm1084, %v977, %v1276
    %v1341 = vsel %vm1085, %v981, %v1277
    %v1342 = vsel %vm1086, %v983, %v1278
    %v1343 = vsel %vm1087, %v985, %v1279
    %v1344 = vsel %vm1088, %v987, %v1280
    %v1345 = vsel %vm1089, %v991, %v1281
    %v1346 = vsel %vm1090, %v993, %v1282
    %v1347 = vsel %vm1091, %v995, %v1283
    %v1348 = vsel %vm1092, %v997, %v1284
    %v1349 = vsel %vm1093, %v1001, %v1285
    %v1350 = vsel %vm1094, %v1003, %v1286
    %v1351 = vsel %vm1095, %v1005, %v1287
    %v1352 = vsel %vm1096, %v1007, %v1288
    %v1353 = vsel %vm1097, %v1011, %v1289
    %v1354 = vsel %vm1098, %v1013, %v1290
    %v1355 = vsel %vm1099, %v1015, %v1291
    %v1356 = vsel %vm1100, %v1017, %v1292
    %v1357 = vsel %vm1101, %v1021, %v1293
    %v1358 = vsel %vm1102, %v1023, %v1294
    %v1359 = vsel %vm1103, %v1025, %v1295
    %v1360 = vsel %vm1104, %v1027, %v1296
    %v1361 = vsel %vm1105, %v1031, %v1297
    %v1362 = vsel %vm1106, %v1033, %v1298
    %v1363 = vsel %vm1107, %v1035, %v1299
    %v1364 = vsel %vm1108, %v1037, %v1300
    %v1365 = vsel %vm1109, %v1041, %v1301
    %v1366 = vsel %vm1110, %v1043, %v1302
    %v1367 = vsel %vm1111, %v1045, %v1303
    %v1368 = vsel %vm1112, %v1047, %v1304
    %v1369 = vpack.c.bf16 %v1307, %v1305
    %v1370 = vpack.c.bf16 %v1308, %v1306
    %v1371 = vpack.c.bf16 %v1311, %v1309
    %v1372 = vpack.c.bf16 %v1312, %v1310
    %v1373 = vpack.c.bf16 %v1315, %v1313
    %v1374 = vpack.c.bf16 %v1316, %v1314
    %v1375 = vpack.c.bf16 %v1319, %v1317
    %v1376 = vpack.c.bf16 %v1320, %v1318
    %v1377 = vpack.c.bf16 %v1323, %v1321
    %v1378 = vpack.c.bf16 %v1324, %v1322
    %v1379 = vpack.c.bf16 %v1327, %v1325
    %v1380 = vpack.c.bf16 %v1328, %v1326
    %v1381 = vpack.c.bf16 %v1331, %v1329
    %v1382 = vpack.c.bf16 %v1332, %v1330
    %v1383 = vpack.c.bf16 %v1335, %v1333
    %v1384 = vpack.c.bf16 %v1336, %v1334
    %v1385 = vpack.c.bf16 %v1339, %v1337
    %v1386 = vpack.c.bf16 %v1340, %v1338
    %v1387 = vpack.c.bf16 %v1343, %v1341
    %v1388 = vpack.c.bf16 %v1344, %v1342
    %v1389 = vpack.c.bf16 %v1347, %v1345
    %v1390 = vpack.c.bf16 %v1348, %v1346
    %v1391 = vpack.c.bf16 %v1351, %v1349
    %v1392 = vpack.c.bf16 %v1352, %v1350
    %v1393 = vpack.c.bf16 %v1355, %v1353
    %v1394 = vpack.c.bf16 %v1356, %v1354
    %v1395 = vpack.c.bf16 %v1359, %v1357
    %v1396 = vpack.c.bf16 %v1360, %v1358
    %v1397 = vpack.c.bf16 %v1363, %v1361
    %v1398 = vpack.c.bf16 %v1364, %v1362
    %v1399 = vpack.c.bf16 %v1367, %v1365
    %v1400 = vpack.c.bf16 %v1368, %v1366
    %v1401 = vld [vmem:[#allocation3] sm:$0xf]
    %v1402 = vld [vmem:[#allocation3 + $0x4] sm:$0xf]
    %v1403 = vld [vmem:[#allocation3 + $0x8] sm:$0xf]
    %v1404 = vld [vmem:[#allocation3 + $0xc] sm:$0xf]
    %v1405 = vld [vmem:[#allocation3 + $0x10] sm:$0xf]
    %v1406 = vld [vmem:[#allocation3 + $0x14] sm:$0xf]
    %v1407 = vld [vmem:[#allocation3 + $0x18] sm:$0xf]
    %v1408 = vld [vmem:[#allocation3 + $0x1c] sm:$0xf]
    %v1409 = vld [vmem:[#allocation3 + $0x20] sm:$0xf]
    %v1410 = vld [vmem:[#allocation3 + $0x24] sm:$0xf]
    %v1411 = vld [vmem:[#allocation3 + $0x28] sm:$0xf]
    %v1412 = vld [vmem:[#allocation3 + $0x2c] sm:$0xf]
    %v1413 = vld [vmem:[#allocation3 + $0x30] sm:$0xf]
    %v1414 = vld [vmem:[#allocation3 + $0x34] sm:$0xf]
    %v1415 = vld [vmem:[#allocation3 + $0x38] sm:$0xf]
    %v1416 = vld [vmem:[#allocation3 + $0x3c] sm:$0xf]
    %v1417 = vld [vmem:[#allocation3 + $0x40] sm:$0xf]
    %v1418 = vld [vmem:[#allocation3 + $0x44] sm:$0xf]
    %v1419 = vld [vmem:[#allocation3 + $0x48] sm:$0xf]
    %v1420 = vld [vmem:[#allocation3 + $0x4c] sm:$0xf]
    %v1421 = vld [vmem:[#allocation3 + $0x50] sm:$0xf]
    %v1422 = vld [vmem:[#allocation3 + $0x54] sm:$0xf]
    %v1423 = vld [vmem:[#allocation3 + $0x58] sm:$0xf]
    %v1424 = vld [vmem:[#allocation3 + $0x5c] sm:$0xf]
    %v1425 = vld [vmem:[#allocation3 + $0x60] sm:$0xf]
    %v1426 = vld [vmem:[#allocation3 + $0x64] sm:$0xf]
    %v1427 = vld [vmem:[#allocation3 + $0x68] sm:$0xf]
    %v1428 = vld [vmem:[#allocation3 + $0x6c] sm:$0xf]
    %v1429 = vld [vmem:[#allocation3 + $0x70] sm:$0xf]
    %v1430 = vld [vmem:[#allocation3 + $0x74] sm:$0xf]
    %v1431 = vld [vmem:[#allocation3 + $0x78] sm:$0xf]
    %v1432 = vld [vmem:[#allocation3 + $0x7c] sm:$0xf]
    %v1433 = vld [vmem:[%s4] sm:$0x1]
    %v1435 = vlaneseq
    %v1436 = vshrl.u32 %v1435, 7
    %v1437 = vsub.s32 0, %v1436
    %v1438 = vrot.slane %v1433, %v1437
    %v1472 = vunpack.c.l.b16 %v1401
    %v1473 = vunpack.c.l.b16 %v1402
    %v1474 = vunpack.c.l.b16 %v1403
    %v1475 = vunpack.c.l.b16 %v1404
    %v1476 = vunpack.c.l.b16 %v1405
    %v1477 = vunpack.c.l.b16 %v1406
    %v1478 = vunpack.c.l.b16 %v1407
    %v1479 = vunpack.c.l.b16 %v1408
    %v1480 = vunpack.c.l.b16 %v1409
    %v1481 = vunpack.c.l.b16 %v1410
    %v1482 = vunpack.c.l.b16 %v1411
    %v1483 = vunpack.c.l.b16 %v1412
    %v1484 = vunpack.c.l.b16 %v1413
    %v1485 = vunpack.c.l.b16 %v1414
    %v1486 = vunpack.c.l.b16 %v1415
    %v1487 = vunpack.c.l.b16 %v1416
    %v1488 = vunpack.c.l.b16 %v1417
    %v1489 = vunpack.c.l.b16 %v1418
    %v1490 = vunpack.c.l.b16 %v1419
    %v1491 = vunpack.c.l.b16 %v1420
    %v1492 = vunpack.c.l.b16 %v1421
    %v1493 = vunpack.c.l.b16 %v1422
    %v1494 = vunpack.c.l.b16 %v1423
    %v1495 = vunpack.c.l.b16 %v1424
    %v1496 = vunpack.c.l.b16 %v1425
    %v1497 = vunpack.c.l.b16 %v1426
    %v1498 = vunpack.c.l.b16 %v1427
    %v1499 = vunpack.c.l.b16 %v1428
    %v1500 = vunpack.c.l.b16 %v1429
    %v1501 = vunpack.c.l.b16 %v1430
    %v1502 = vunpack.c.l.b16 %v1431
    %v1503 = vunpack.c.l.b16 %v1432
    %v1504 = vpack.c.b16 %v1473, %v1472
    %v1505 = vpack.c.b16 %v1475, %v1474
    %v1506 = vpack.c.b16 %v1477, %v1476
    %v1507 = vpack.c.b16 %v1479, %v1478
    %v1508 = vpack.c.b16 %v1481, %v1480
    %v1509 = vpack.c.b16 %v1483, %v1482
    %v1510 = vpack.c.b16 %v1485, %v1484
    %v1511 = vpack.c.b16 %v1487, %v1486
    %v1512 = vpack.c.b16 %v1489, %v1488
    %v1513 = vpack.c.b16 %v1491, %v1490
    %v1514 = vpack.c.b16 %v1493, %v1492
    %v1515 = vpack.c.b16 %v1495, %v1494
    %v1516 = vpack.c.b16 %v1497, %v1496
    %v1517 = vpack.c.b16 %v1499, %v1498
    %v1518 = vpack.c.b16 %v1501, %v1500
    %v1519 = vpack.c.b16 %v1503, %v1502
    %1536 = vmatprep.subr.bf16.mxu0 0
    %1537 = vmatpush1.bf16.msra.mxu0 %v1504
    %1538 = vmatprep.subr.bf16.mxu0 0
    %1539 = vmatpush1.bf16.msra.mxu0 %v1505
    %1540 = vmatprep.subr.bf16.mxu0 0
    %1541 = vmatpush1.bf16.msra.mxu0 %v1506
    %1542 = vmatprep.subr.bf16.mxu0 0
    %1543 = vmatpush1.bf16.msra.mxu0 %v1507
    %1544 = vmatprep.subr.bf16.mxu0 0
    %1545 = vmatpush1.bf16.msra.mxu0 %v1508
    %1546 = vmatprep.subr.bf16.mxu0 0
    %1547 = vmatpush1.bf16.msra.mxu0 %v1509
    %1548 = vmatprep.subr.bf16.mxu0 0
    %1549 = vmatpush1.bf16.msra.mxu0 %v1510
    %1550 = vmatprep.subr.bf16.mxu0 0
    %1551 = vmatpush1.bf16.msra.mxu0 %v1511
    %1552 = vmatprep.subr.bf16.mxu0 0
    %1553 = vmatpush1.bf16.msra.mxu0 %v1512
    %1554 = vmatprep.subr.bf16.mxu0 0
    %1555 = vmatpush1.bf16.msra.mxu0 %v1513
    %1556 = vmatprep.subr.bf16.mxu0 0
    %1557 = vmatpush1.bf16.msra.mxu0 %v1514
    %1558 = vmatprep.subr.bf16.mxu0 0
    %1559 = vmatpush1.bf16.msra.mxu0 %v1515
    %1560 = vmatprep.subr.bf16.mxu0 0
    %1561 = vmatpush1.bf16.msra.mxu0 %v1516
    %1562 = vmatprep.subr.bf16.mxu0 0
    %1563 = vmatpush1.bf16.msra.mxu0 %v1517
    %1564 = vmatprep.subr.bf16.mxu0 0
    %1565 = vmatpush1.bf16.msra.mxu0 %v1518
    %1566 = vmatprep.subr.bf16.mxu0 0
    %1567 = vmatpush1.bf16.msra.mxu0 %v1519
    %1568 = vmatprep.mubr.bf16.mxu0 %v1370
    %1569 = vmatmul.mubr.bf16.gmra.mrb[0].mxu0 %v1369
    %v1570 = vpop.f32.mrb[0].mxu0
    %v1571 = vadd.f32 %v1438, %v1570
    %v1572 = vpop.f32.mrb[0].mxu0
    %v1573 = vpop.f32.mrb[0].mxu0
    %v1574 = vadd.f32 %v1438, %v1573
    %v1575 = vpop.f32.mrb[0].mxu0
    %1576 = vmatprep.mubr.bf16.mxu0 %v1372
    %1577 = vmatmul.mubr.bf16.gmra.mrb[0].mxu0 %v1371
    %v1578 = vpop.f32.mrb[0].mxu0
    %v1579 = vadd.f32 %v1438, %v1578
    %v1580 = vpop.f32.mrb[0].mxu0
    %v1581 = vpop.f32.mrb[0].mxu0
    %v1582 = vadd.f32 %v1438, %v1581
    %v1583 = vpop.f32.mrb[0].mxu0
    %1584 = vmatprep.mubr.bf16.mxu0 %v1374
    %1585 = vmatmul.mubr.bf16.gmra.mrb[0].mxu0 %v1373
    %v1586 = vpop.f32.mrb[0].mxu0
    %v1587 = vadd.f32 %v1438, %v1586
    %v1588 = vpop.f32.mrb[0].mxu0
    %v1589 = vpop.f32.mrb[0].mxu0
    %v1590 = vadd.f32 %v1438, %v1589
    %v1591 = vpop.f32.mrb[0].mxu0
    %1592 = vmatprep.mubr.bf16.mxu0 %v1376
    %1593 = vmatmul.mubr.bf16.gmra.mrb[0].mxu0 %v1375
    %v1594 = vpop.f32.mrb[0].mxu0
    %v1595 = vadd.f32 %v1438, %v1594
    %v1596 = vpop.f32.mrb[0].mxu0
    %v1597 = vpop.f32.mrb[0].mxu0
    %v1598 = vadd.f32 %v1438, %v1597
    %v1599 = vpop.f32.mrb[0].mxu0
    %1600 = vmatprep.mubr.bf16.mxu0 %v1378
    %1601 = vmatmul.mubr.bf16.gmra.mrb[0].mxu0 %v1377
    %v1602 = vpop.f32.mrb[0].mxu0
    %v1603 = vadd.f32 %v1438, %v1602
    %v1604 = vpop.f32.mrb[0].mxu0
    %v1605 = vpop.f32.mrb[0].mxu0
    %v1606 = vadd.f32 %v1438, %v1605
    %v1607 = vpop.f32.mrb[0].mxu0
    %1608 = vmatprep.mubr.bf16.mxu0 %v1380
    %1609 = vmatmul.mubr.bf16.gmra.mrb[0].mxu0 %v1379
    %v1610 = vpop.f32.mrb[0].mxu0
    %v1611 = vadd.f32 %v1438, %v1610
    %v1612 = vpop.f32.mrb[0].mxu0
    %v1613 = vpop.f32.mrb[0].mxu0
    %v1614 = vadd.f32 %v1438, %v1613
    %v1615 = vpop.f32.mrb[0].mxu0
    %1616 = vmatprep.mubr.bf16.mxu0 %v1382
    %1617 = vmatmul.mubr.bf16.gmra.mrb[0].mxu0 %v1381
    %v1618 = vpop.f32.mrb[0].mxu0
    %v1619 = vadd.f32 %v1438, %v1618
    %v1620 = vpop.f32.mrb[0].mxu0
    %v1621 = vpop.f32.mrb[0].mxu0
    %v1622 = vadd.f32 %v1438, %v1621
    %v1623 = vpop.f32.mrb[0].mxu0
    %1624 = vmatprep.mubr.bf16.mxu0 %v1384
    %1625 = vmatmul.mubr.bf16.gmra.mrb[0].mxu0 %v1383
    %v1626 = vpop.f32.mrb[0].mxu0
    %v1627 = vadd.f32 %v1438, %v1626
    %v1628 = vpop.f32.mrb[0].mxu0
    %v1629 = vpop.f32.mrb[0].mxu0
    %v1630 = vadd.f32 %v1438, %v1629
    %v1631 = vpop.f32.mrb[0].mxu0
    %1632 = vmatprep.mubr.bf16.mxu0 %v1386
    %1633 = vmatmul.mubr.bf16.gmra.mrb[0].mxu0 %v1385
    %v1634 = vpop.f32.mrb[0].mxu0
    %v1635 = vadd.f32 %v1438, %v1634
    %v1636 = vpop.f32.mrb[0].mxu0
    %v1637 = vpop.f32.mrb[0].mxu0
    %v1638 = vadd.f32 %v1438, %v1637
    %v1639 = vpop.f32.mrb[0].mxu0
    %1640 = vmatprep.mubr.bf16.mxu0 %v1388
    %1641 = vmatmul.mubr.bf16.gmra.mrb[0].mxu0 %v1387
    %v1642 = vpop.f32.mrb[0].mxu0
    %v1643 = vadd.f32 %v1438, %v1642
    %v1644 = vpop.f32.mrb[0].mxu0
    %v1645 = vpop.f32.mrb[0].mxu0
    %v1646 = vadd.f32 %v1438, %v1645
    %v1647 = vpop.f32.mrb[0].mxu0
    %1648 = vmatprep.mubr.bf16.mxu0 %v1390
    %1649 = vmatmul.mubr.bf16.gmra.mrb[0].mxu0 %v1389
    %v1650 = vpop.f32.mrb[0].mxu0
    %v1651 = vadd.f32 %v1438, %v1650
    %v1652 = vpop.f32.mrb[0].mxu0
    %v1653 = vpop.f32.mrb[0].mxu0
    %v1654 = vadd.f32 %v1438, %v1653
    %v1655 = vpop.f32.mrb[0].mxu0
    %1656 = vmatprep.mubr.bf16.mxu0 %v1392
    %1657 = vmatmul.mubr.bf16.gmra.mrb[0].mxu0 %v1391
    %v1658 = vpop.f32.mrb[0].mxu0
    %v1659 = vadd.f32 %v1438, %v1658
    %v1660 = vpop.f32.mrb[0].mxu0
    %v1661 = vpop.f32.mrb[0].mxu0
    %v1662 = vadd.f32 %v1438, %v1661
    %v1663 = vpop.f32.mrb[0].mxu0
    %1664 = vmatprep.mubr.bf16.mxu0 %v1394
    %1665 = vmatmul.mubr.bf16.gmra.mrb[0].mxu0 %v1393
    %v1666 = vpop.f32.mrb[0].mxu0
    %v1667 = vadd.f32 %v1438, %v1666
    %v1668 = vpop.f32.mrb[0].mxu0
    %v1669 = vpop.f32.mrb[0].mxu0
    %v1670 = vadd.f32 %v1438, %v1669
    %v1671 = vpop.f32.mrb[0].mxu0
    %1672 = vmatprep.mubr.bf16.mxu0 %v1396
    %1673 = vmatmul.mubr.bf16.gmra.mrb[0].mxu0 %v1395
    %v1674 = vpop.f32.mrb[0].mxu0
    %v1675 = vadd.f32 %v1438, %v1674
    %v1676 = vpop.f32.mrb[0].mxu0
    %v1677 = vpop.f32.mrb[0].mxu0
    %v1678 = vadd.f32 %v1438, %v1677
    %v1679 = vpop.f32.mrb[0].mxu0
    %1680 = vmatprep.mubr.bf16.mxu0 %v1398
    %1681 = vmatmul.mubr.bf16.gmra.mrb[0].mxu0 %v1397
    %v1682 = vpop.f32.mrb[0].mxu0
    %v1683 = vadd.f32 %v1438, %v1682
    %v1684 = vpop.f32.mrb[0].mxu0
    %v1685 = vpop.f32.mrb[0].mxu0
    %v1686 = vadd.f32 %v1438, %v1685
    %v1687 = vpop.f32.mrb[0].mxu0
    %1688 = vmatprep.mubr.bf16.mxu0 %v1400
    %1689 = vmatmul.mubr.bf16.gmra.mrb[0].mxu0 %v1399
    %v1690 = vpop.f32.mrb[0].mxu0
    %v1691 = vadd.f32 %v1438, %v1690
    %v1692 = vpop.f32.mrb[0].mxu0
    %v1693 = vpop.f32.mrb[0].mxu0
    %v1694 = vadd.f32 %v1438, %v1693
    %v1695 = vpop.f32.mrb[0].mxu0
    %1696 = vdwg.mxu0
    %vm1697 = vcmp.gt.f32.partialorder %v1571, 0.0
    %vm1698 = vcmp.gt.f32.partialorder %v1574, 0.0
    %vm1699 = vcmp.gt.f32.partialorder %v1579, 0.0
    %vm1700 = vcmp.gt.f32.partialorder %v1582, 0.0
    %vm1701 = vcmp.gt.f32.partialorder %v1587, 0.0
    %vm1702 = vcmp.gt.f32.partialorder %v1590, 0.0
    %vm1703 = vcmp.gt.f32.partialorder %v1595, 0.0
    %vm1704 = vcmp.gt.f32.partialorder %v1598, 0.0
    %vm1705 = vcmp.gt.f32.partialorder %v1603, 0.0
    %vm1706 = vcmp.gt.f32.partialorder %v1606, 0.0
    %vm1707 = vcmp.gt.f32.partialorder %v1611, 0.0
    %vm1708 = vcmp.gt.f32.partialorder %v1614, 0.0
    %vm1709 = vcmp.gt.f32.partialorder %v1619, 0.0
    %vm1710 = vcmp.gt.f32.partialorder %v1622, 0.0
    %vm1711 = vcmp.gt.f32.partialorder %v1627, 0.0
    %vm1712 = vcmp.gt.f32.partialorder %v1630, 0.0
    %vm1713 = vcmp.gt.f32.partialorder %v1635, 0.0
    %vm1714 = vcmp.gt.f32.partialorder %v1638, 0.0
    %vm1715 = vcmp.gt.f32.partialorder %v1643, 0.0
    %vm1716 = vcmp.gt.f32.partialorder %v1646, 0.0
    %vm1717 = vcmp.gt.f32.partialorder %v1651, 0.0
    %vm1718 = vcmp.gt.f32.partialorder %v1654, 0.0
    %vm1719 = vcmp.gt.f32.partialorder %v1659, 0.0
    %vm1720 = vcmp.gt.f32.partialorder %v1662, 0.0
    %vm1721 = vcmp.gt.f32.partialorder %v1667, 0.0
    %vm1722 = vcmp.gt.f32.partialorder %v1670, 0.0
    %vm1723 = vcmp.gt.f32.partialorder %v1675, 0.0
    %vm1724 = vcmp.gt.f32.partialorder %v1678, 0.0
    %vm1725 = vcmp.gt.f32.partialorder %v1683, 0.0
    %vm1726 = vcmp.gt.f32.partialorder %v1686, 0.0
    %vm1727 = vcmp.gt.f32.partialorder %v1691, 0.0
    %vm1728 = vcmp.gt.f32.partialorder %v1694, 0.0
    %v1729 = vmul.f32 %v1571, 1.442695
    %v1730 = vpow.pop %v1729
    %v1731 = vmul.f32 %v1574, 1.442695
    %v1732 = vpow.pop %v1731
    %v1733 = vmul.f32 %v1579, 1.442695
    %v1734 = vpow.pop %v1733
    %v1735 = vmul.f32 %v1582, 1.442695
    %v1736 = vpow.pop %v1735
    %v1737 = vmul.f32 %v1587, 1.442695
    %v1738 = vpow.pop %v1737
    %v1739 = vmul.f32 %v1590, 1.442695
    %v1740 = vpow.pop %v1739
    %v1741 = vmul.f32 %v1595, 1.442695
    %v1742 = vpow.pop %v1741
    %v1743 = vmul.f32 %v1598, 1.442695
    %v1744 = vpow.pop %v1743
    %v1745 = vmul.f32 %v1603, 1.442695
    %v1746 = vpow.pop %v1745
    %v1747 = vmul.f32 %v1606, 1.442695
    %v1748 = vpow.pop %v1747
    %v1749 = vmul.f32 %v1611, 1.442695
    %v1750 = vpow.pop %v1749
    %v1751 = vmul.f32 %v1614, 1.442695
    %v1752 = vpow.pop %v1751
    %v1753 = vmul.f32 %v1619, 1.442695
    %v1754 = vpow.pop %v1753
    %v1755 = vmul.f32 %v1622, 1.442695
    %v1756 = vpow.pop %v1755
    %v1757 = vmul.f32 %v1627, 1.442695
    %v1758 = vpow.pop %v1757
    %v1759 = vmul.f32 %v1630, 1.442695
    %v1760 = vpow.pop %v1759
    %v1761 = vmul.f32 %v1635, 1.442695
    %v1762 = vpow.pop %v1761
    %v1763 = vmul.f32 %v1638, 1.442695
    %v1764 = vpow.pop %v1763
    %v1765 = vmul.f32 %v1643, 1.442695
    %v1766 = vpow.pop %v1765
    %v1767 = vmul.f32 %v1646, 1.442695
    %v1768 = vpow.pop %v1767
    %v1769 = vmul.f32 %v1651, 1.442695
    %v1770 = vpow.pop %v1769
    %v1771 = vmul.f32 %v1654, 1.442695
    %v1772 = vpow.pop %v1771
    %v1773 = vmul.f32 %v1659, 1.442695
    %v1774 = vpow.pop %v1773
    %v1775 = vmul.f32 %v1662, 1.442695
    %v1776 = vpow.pop %v1775
    %v1777 = vmul.f32 %v1667, 1.442695
    %v1778 = vpow.pop %v1777
    %v1779 = vmul.f32 %v1670, 1.442695
    %v1780 = vpow.pop %v1779
    %v1781 = vmul.f32 %v1675, 1.442695
    %v1782 = vpow.pop %v1781
    %v1783 = vmul.f32 %v1678, 1.442695
    %v1784 = vpow.pop %v1783
    %v1785 = vmul.f32 %v1683, 1.442695
    %v1786 = vpow.pop %v1785
    %v1787 = vmul.f32 %v1686, 1.442695
    %v1788 = vpow.pop %v1787
    %v1789 = vmul.f32 %v1691, 1.442695
    %v1790 = vpow.pop %v1789
    %v1791 = vmul.f32 %v1694, 1.442695
    %v1792 = vpow.pop %v1791
    %v1793 = vsub.f32 %v1730, 1.0
    %v1794 = vsub.f32 %v1732, 1.0
    %v1795 = vsub.f32 %v1734, 1.0
    %v1796 = vsub.f32 %v1736, 1.0
    %v1797 = vsub.f32 %v1738, 1.0
    %v1798 = vsub.f32 %v1740, 1.0
    %v1799 = vsub.f32 %v1742, 1.0
    %v1800 = vsub.f32 %v1744, 1.0
    %v1801 = vsub.f32 %v1746, 1.0
    %v1802 = vsub.f32 %v1748, 1.0
    %v1803 = vsub.f32 %v1750, 1.0
    %v1804 = vsub.f32 %v1752, 1.0
    %v1805 = vsub.f32 %v1754, 1.0
    %v1806 = vsub.f32 %v1756, 1.0
    %v1807 = vsub.f32 %v1758, 1.0
    %v1808 = vsub.f32 %v1760, 1.0
    %v1809 = vsub.f32 %v1762, 1.0
    %v1810 = vsub.f32 %v1764, 1.0
    %v1811 = vsub.f32 %v1766, 1.0
    %v1812 = vsub.f32 %v1768, 1.0
    %v1813 = vsub.f32 %v1770, 1.0
    %v1814 = vsub.f32 %v1772, 1.0
    %v1815 = vsub.f32 %v1774, 1.0
    %v1816 = vsub.f32 %v1776, 1.0
    %v1817 = vsub.f32 %v1778, 1.0
    %v1818 = vsub.f32 %v1780, 1.0
    %v1819 = vsub.f32 %v1782, 1.0
    %v1820 = vsub.f32 %v1784, 1.0
    %v1821 = vsub.f32 %v1786, 1.0
    %v1822 = vsub.f32 %v1788, 1.0
    %v1823 = vsub.f32 %v1790, 1.0
    %v1824 = vsub.f32 %v1792, 1.0
    %v1825 = vsel %vm1697, %v1571, %v1793
    %v1826 = vsel %vm1698, %v1574, %v1794
    %v1827 = vsel %vm1699, %v1579, %v1795
    %v1828 = vsel %vm1700, %v1582, %v1796
    %v1829 = vsel %vm1701, %v1587, %v1797
    %v1830 = vsel %vm1702, %v1590, %v1798
    %v1831 = vsel %vm1703, %v1595, %v1799
    %v1832 = vsel %vm1704, %v1598, %v1800
    %v1833 = vsel %vm1705, %v1603, %v1801
    %v1834 = vsel %vm1706, %v1606, %v1802
    %v1835 = vsel %vm1707, %v1611, %v1803
    %v1836 = vsel %vm1708, %v1614, %v1804
    %v1837 = vsel %vm1709, %v1619, %v1805
    %v1838 = vsel %vm1710, %v1622, %v1806
    %v1839 = vsel %vm1711, %v1627, %v1807
    %v1840 = vsel %vm1712, %v1630, %v1808
    %v1841 = vsel %vm1713, %v1635, %v1809
    %v1842 = vsel %vm1714, %v1638, %v1810
    %v1843 = vsel %vm1715, %v1643, %v1811
    %v1844 = vsel %vm1716, %v1646, %v1812
    %v1845 = vsel %vm1717, %v1651, %v1813
    %v1846 = vsel %vm1718, %v1654, %v1814
    %v1847 = vsel %vm1719, %v1659, %v1815
    %v1848 = vsel %vm1720, %v1662, %v1816
    %v1849 = vsel %vm1721, %v1667, %v1817
    %v1850 = vsel %vm1722, %v1670, %v1818
    %v1851 = vsel %vm1723, %v1675, %v1819
    %v1852 = vsel %vm1724, %v1678, %v1820
    %v1853 = vsel %vm1725, %v1683, %v1821
    %v1854 = vsel %vm1726, %v1686, %v1822
    %v1855 = vsel %vm1727, %v1691, %v1823
    %v1856 = vsel %vm1728, %v1694, %v1824
    %v1857 = vld [vmem:[%s5] sm:$0x1]
    %v1859 = vlaneseq
    %v1860 = vshrl.u32 %v1859, 7
    %v1861 = vsub.s32 0, %v1860
    %v1862 = vrot.slane %v1857, %v1861
    %v1864 = vmul.f32 %v1825, %v1862
    %v1865 = vmul.f32 %v1826, %v1862
    %v1866 = vmul.f32 %v1827, %v1862
    %v1867 = vmul.f32 %v1828, %v1862
    %v1868 = vmul.f32 %v1829, %v1862
    %v1869 = vmul.f32 %v1830, %v1862
    %v1870 = vmul.f32 %v1831, %v1862
    %v1871 = vmul.f32 %v1832, %v1862
    %v1872 = vmul.f32 %v1833, %v1862
    %v1873 = vmul.f32 %v1834, %v1862
    %v1874 = vmul.f32 %v1835, %v1862
    %v1875 = vmul.f32 %v1836, %v1862
    %v1876 = vmul.f32 %v1837, %v1862
    %v1877 = vmul.f32 %v1838, %v1862
    %v1878 = vmul.f32 %v1839, %v1862
    %v1879 = vmul.f32 %v1840, %v1862
    %v1880 = vmul.f32 %v1841, %v1862
    %v1881 = vmul.f32 %v1842, %v1862
    %v1882 = vmul.f32 %v1843, %v1862
    %v1883 = vmul.f32 %v1844, %v1862
    %v1884 = vmul.f32 %v1845, %v1862
    %v1885 = vmul.f32 %v1846, %v1862
    %v1886 = vmul.f32 %v1847, %v1862
    %v1887 = vmul.f32 %v1848, %v1862
    %v1888 = vmul.f32 %v1849, %v1862
    %v1889 = vmul.f32 %v1850, %v1862
    %v1890 = vmul.f32 %v1851, %v1862
    %v1891 = vmul.f32 %v1852, %v1862
    %v1892 = vmul.f32 %v1853, %v1862
    %v1893 = vmul.f32 %v1854, %v1862
    %v1894 = vmul.f32 %v1855, %v1862
    %v1895 = vmul.f32 %v1856, %v1862
    %1896 = vadd.xlane.f32.xlu0 %v1864
    %v1897 = vpop.xlane.xlu0 %1896
    %1898 = vadd.xlane.f32.xlu0 %v1865
    %v1899 = vpop.xlane.xlu0 %1898
    %1900 = vadd.xlane.f32.xlu0 %v1866
    %v1901 = vpop.xlane.xlu0 %1900
    %1902 = vadd.xlane.f32.xlu0 %v1867
    %v1903 = vpop.xlane.xlu0 %1902
    %1904 = vadd.xlane.f32.xlu0 %v1868
    %v1905 = vpop.xlane.xlu0 %1904
    %1906 = vadd.xlane.f32.xlu0 %v1869
    %v1907 = vpop.xlane.xlu0 %1906
    %1908 = vadd.xlane.f32.xlu0 %v1870
    %v1909 = vpop.xlane.xlu0 %1908
    %1910 = vadd.xlane.f32.xlu0 %v1871
    %v1911 = vpop.xlane.xlu0 %1910
    %1912 = vadd.xlane.f32.xlu0 %v1872
    %v1913 = vpop.xlane.xlu0 %1912
    %1914 = vadd.xlane.f32.xlu0 %v1873
    %v1915 = vpop.xlane.xlu0 %1914
    %1916 = vadd.xlane.f32.xlu0 %v1874
    %v1917 = vpop.xlane.xlu0 %1916
    %1918 = vadd.xlane.f32.xlu0 %v1875
    %v1919 = vpop.xlane.xlu0 %1918
    %1920 = vadd.xlane.f32.xlu0 %v1876
    %v1921 = vpop.xlane.xlu0 %1920
    %1922 = vadd.xlane.f32.xlu0 %v1877
    %v1923 = vpop.xlane.xlu0 %1922
    %1924 = vadd.xlane.f32.xlu0 %v1878
    %v1925 = vpop.xlane.xlu0 %1924
    %1926 = vadd.xlane.f32.xlu0 %v1879
    %v1927 = vpop.xlane.xlu0 %1926
    %1928 = vadd.xlane.f32.xlu0 %v1880
    %v1929 = vpop.xlane.xlu0 %1928
    %1930 = vadd.xlane.f32.xlu0 %v1881
    %v1931 = vpop.xlane.xlu0 %1930
    %1932 = vadd.xlane.f32.xlu0 %v1882
    %v1933 = vpop.xlane.xlu0 %1932
    %1934 = vadd.xlane.f32.xlu0 %v1883
    %v1935 = vpop.xlane.xlu0 %1934
    %1936 = vadd.xlane.f32.xlu0 %v1884
    %v1937 = vpop.xlane.xlu0 %1936
    %1938 = vadd.xlane.f32.xlu0 %v1885
    %v1939 = vpop.xlane.xlu0 %1938
    %1940 = vadd.xlane.f32.xlu0 %v1886
    %v1941 = vpop.xlane.xlu0 %1940
    %1942 = vadd.xlane.f32.xlu0 %v1887
    %v1943 = vpop.xlane.xlu0 %1942
    %1944 = vadd.xlane.f32.xlu0 %v1888
    %v1945 = vpop.xlane.xlu0 %1944
    %1946 = vadd.xlane.f32.xlu0 %v1889
    %v1947 = vpop.xlane.xlu0 %1946
    %1948 = vadd.xlane.f32.xlu0 %v1890
    %v1949 = vpop.xlane.xlu0 %1948
    %1950 = vadd.xlane.f32.xlu0 %v1891
    %v1951 = vpop.xlane.xlu0 %1950
    %1952 = vadd.xlane.f32.xlu0 %v1892
    %v1953 = vpop.xlane.xlu0 %1952
    %1954 = vadd.xlane.f32.xlu0 %v1893
    %v1955 = vpop.xlane.xlu0 %1954
    %1956 = vadd.xlane.f32.xlu0 %v1894
    %v1957 = vpop.xlane.xlu0 %1956
    %1958 = vadd.xlane.f32.xlu0 %v1895
    %v1959 = vpop.xlane.xlu0 %1958
    %v1960 = vld [vmem:[#allocation2] sm:$0x1]
    %v1962 = vlaneseq
    %v1963 = vshrl.u32 %v1962, 7
    %v1964 = vsub.s32 0, %v1963
    %v1965 = vrot.slane %v1960, %v1964
    %v1967 = vadd.f32 %v1897, %v1965
    %v1968 = vadd.f32 %v1899, %v1965
    %v1969 = vadd.f32 %v1901, %v1965
    %v1970 = vadd.f32 %v1903, %v1965
    %v1971 = vadd.f32 %v1905, %v1965
    %v1972 = vadd.f32 %v1907, %v1965
    %v1973 = vadd.f32 %v1909, %v1965
    %v1974 = vadd.f32 %v1911, %v1965
    %v1975 = vadd.f32 %v1913, %v1965
    %v1976 = vadd.f32 %v1915, %v1965
    %v1977 = vadd.f32 %v1917, %v1965
    %v1978 = vadd.f32 %v1919, %v1965
    %v1979 = vadd.f32 %v1921, %v1965
    %v1980 = vadd.f32 %v1923, %v1965
    %v1981 = vadd.f32 %v1925, %v1965
    %v1982 = vadd.f32 %v1927, %v1965
    %v1983 = vadd.f32 %v1929, %v1965
    %v1984 = vadd.f32 %v1931, %v1965
    %v1985 = vadd.f32 %v1933, %v1965
    %v1986 = vadd.f32 %v1935, %v1965
    %v1987 = vadd.f32 %v1937, %v1965
    %v1988 = vadd.f32 %v1939, %v1965
    %v1989 = vadd.f32 %v1941, %v1965
    %v1990 = vadd.f32 %v1943, %v1965
    %v1991 = vadd.f32 %v1945, %v1965
    %v1992 = vadd.f32 %v1947, %v1965
    %v1993 = vadd.f32 %v1949, %v1965
    %v1994 = vadd.f32 %v1951, %v1965
    %v1995 = vadd.f32 %v1953, %v1965
    %v1996 = vadd.f32 %v1955, %v1965
    %v1997 = vadd.f32 %v1957, %v1965
    %v1998 = vadd.f32 %v1959, %v1965
    %v1999 = vtanh.pop %v1967
    %v2000 = vtanh.pop %v1968
    %v2001 = vtanh.pop %v1969
    %v2002 = vtanh.pop %v1970
    %v2003 = vtanh.pop %v1971
    %v2004 = vtanh.pop %v1972
    %v2005 = vtanh.pop %v1973
    %v2006 = vtanh.pop %v1974
    %v2007 = vtanh.pop %v1975
    %v2008 = vtanh.pop %v1976
    %v2009 = vtanh.pop %v1977
    %v2010 = vtanh.pop %v1978
    %v2011 = vtanh.pop %v1979
    %v2012 = vtanh.pop %v1980
    %v2013 = vtanh.pop %v1981
    %v2014 = vtanh.pop %v1982
    %v2015 = vtanh.pop %v1983
    %v2016 = vtanh.pop %v1984
    %v2017 = vtanh.pop %v1985
    %v2018 = vtanh.pop %v1986
    %v2019 = vtanh.pop %v1987
    %v2020 = vtanh.pop %v1988
    %v2021 = vtanh.pop %v1989
    %v2022 = vtanh.pop %v1990
    %v2023 = vtanh.pop %v1991
    %v2024 = vtanh.pop %v1992
    %v2025 = vtanh.pop %v1993
    %v2026 = vtanh.pop %v1994
    %v2027 = vtanh.pop %v1995
    %v2028 = vtanh.pop %v1996
    %v2029 = vtanh.pop %v1997
    %v2030 = vtanh.pop %v1998
    %vm2031 = vcmask 7168
    %2032 = vst.msk [vmem:[%s7] sm:$0xff] %vm2031, %v1999
    %2033 = vst.msk [vmem:[%s7 + $0x8] sm:$0xff] %vm2031, %v2000
    %2034 = vst.msk [vmem:[%s7 + $0x10] sm:$0xff] %vm2031, %v2001
    %2035 = vst.msk [vmem:[%s7 + $0x18] sm:$0xff] %vm2031, %v2002
    %2036 = vst.msk [vmem:[%s7 + $0x20] sm:$0xff] %vm2031, %v2003
    %2037 = vst.msk [vmem:[%s7 + $0x28] sm:$0xff] %vm2031, %v2004
    %2038 = vst.msk [vmem:[%s7 + $0x30] sm:$0xff] %vm2031, %v2005
    %2039 = vst.msk [vmem:[%s7 + $0x38] sm:$0xff] %vm2031, %v2006
    %2040 = vst.msk [vmem:[%s7 + $0x40] sm:$0xff] %vm2031, %v2007
    %2041 = vst.msk [vmem:[%s7 + $0x48] sm:$0xff] %vm2031, %v2008
    %2042 = vst.msk [vmem:[%s7 + $0x50] sm:$0xff] %vm2031, %v2009
    %2043 = vst.msk [vmem:[%s7 + $0x58] sm:$0xff] %vm2031, %v2010
    %2044 = vst.msk [vmem:[%s7 + $0x60] sm:$0xff] %vm2031, %v2011
    %2045 = vst.msk [vmem:[%s7 + $0x68] sm:$0xff] %vm2031, %v2012
    %2046 = vst.msk [vmem:[%s7 + $0x70] sm:$0xff] %vm2031, %v2013
    %2047 = vst.msk [vmem:[%s7 + $0x78] sm:$0xff] %vm2031, %v2014
    %2048 = vst.msk [vmem:[%s7 + $0x80] sm:$0xff] %vm2031, %v2015
    %2049 = vst.msk [vmem:[%s7 + $0x88] sm:$0xff] %vm2031, %v2016
    %2050 = vst.msk [vmem:[%s7 + $0x90] sm:$0xff] %vm2031, %v2017
    %2051 = vst.msk [vmem:[%s7 + $0x98] sm:$0xff] %vm2031, %v2018
    %2052 = vst.msk [vmem:[%s7 + $0xa0] sm:$0xff] %vm2031, %v2019
    %2053 = vst.msk [vmem:[%s7 + $0xa8] sm:$0xff] %vm2031, %v2020
    %2054 = vst.msk [vmem:[%s7 + $0xb0] sm:$0xff] %vm2031, %v2021
    %2055 = vst.msk [vmem:[%s7 + $0xb8] sm:$0xff] %vm2031, %v2022
    %2056 = vst.msk [vmem:[%s7 + $0xc0] sm:$0xff] %vm2031, %v2023
    %2057 = vst.msk [vmem:[%s7 + $0xc8] sm:$0xff] %vm2031, %v2024
    %2058 = vst.msk [vmem:[%s7 + $0xd0] sm:$0xff] %vm2031, %v2025
    %2059 = vst.msk [vmem:[%s7 + $0xd8] sm:$0xff] %vm2031, %v2026
    %2060 = vst.msk [vmem:[%s7 + $0xe0] sm:$0xff] %vm2031, %v2027
    %2061 = vst.msk [vmem:[%s7 + $0xe8] sm:$0xff] %vm2031, %v2028
    %2062 = vst.msk [vmem:[%s7 + $0xf0] sm:$0xff] %vm2031, %v2029
    %2063 = vst.msk [vmem:[%s7 + $0xf8] sm:$0xff] %vm2031, %v2030
    // Predicated region
    $region34: #{valuenet_forward.1} parent=1 // pred_check
      _
    $region35: #{valuenet_forward.1} parent=1 // pred_check_branch
      %2065 = sbr.rel (0) target = $region37
    $region36: #{valuenet_forward.1} parent=1 // pred_region
      _
    $region37: #{valuenet_forward.1} parent=1 // pred_fallthru
      _
    // Predicated region
    $region38: #{valuenet_forward.1} parent=1 // pred_check
      _
    $region39: #{valuenet_forward.1} parent=1 // pred_check_branch
      %2067 = sbr.rel (0) target = $region41
    $region40: #{valuenet_forward.1} parent=1 // pred_region
      _
    $region41: #{valuenet_forward.1} parent=1 // pred_fallthru
      _
    %2068 = vsyncpa [#allocation4], 1

</llo_original>
